<compile_context>
chip_gen: v5e
topology: v5e:2x2
jax: 0.10.0
libtpu: 0.0.40
codegen_flags: <defaults>
</compile_context>

<pallas_src>
import jax
import jax.numpy as jnp
from jax.experimental import pallas as pl
from jax.experimental.pallas import tpu as pltpu

LANE = 128
SUBLANE = 8


def _round_up(x, m):
    return ((x + m - 1) // m) * m


def _cdiv(a, b):
    return -(-a // b)


# ---------------------------------------------------------------------------
# kernel bodies
# ---------------------------------------------------------------------------

def _mlp_body(h_parts, w1_refs, b1_ref, wb_refs, o_ref, out_cols, apply_sigmoid):
    """8-layer MLP on one row tile.

    h_parts : list of bf16 (tb, k_i) activations whose concat is the layer-1
              input; w1_refs are the matching (k_i, 128) slices of W1.
    wb_refs : (w2, b2, ..., w8, b8); weights bf16 (128, 128), biases f32 (1, 128).
    Only the first `out_cols` lanes of the last layer are real; they are
    (optionally sigmoid'ed and) written to o_ref (tb, out_cols) f32.
    """
    # layer 1: sum of partial dots over the (unpadded) input halves, f32 acc
    y = b1_ref[...]                                           # (1, 128) f32
    for h, w_ref in zip(h_parts, w1_refs):
        y = y + jnp.dot(h, w_ref[...], preferred_element_type=jnp.float32)
    h = jnp.maximum(y, 0.0).astype(jnp.bfloat16)

    # layers 2..8 (ReLU on all but the last)
    n_rest = len(wb_refs) // 2
    for li in range(n_rest):
        w_ref = wb_refs[2 * li]
        b_ref = wb_refs[2 * li + 1]
        y = jnp.dot(h, w_ref[...], preferred_element_type=jnp.float32) + b_ref[...]
        if li < n_rest - 1:
            h = jnp.maximum(y, 0.0).astype(jnp.bfloat16)

    out = y[:, :out_cols]                                     # (tb, out_cols) f32
    if apply_sigmoid:
        # EUP exp; slot is otherwise idle in this kernel, so this is ~free.
        out = 1.0 / (1.0 + jnp.exp(-out))
    o_ref[...] = out.astype(o_ref.dtype)


def _make_rows_kernel(out_cols, apply_sigmoid):
    """x given as one (tb, in_dim) tile (any float dtype; cast to bf16 here)."""
    def kernel(x_ref, *refs):
        o_ref = refs[-1]
        w1, b1 = refs[0], refs[1]
        _mlp_body([x_ref[...].astype(jnp.bfloat16)], [w1], b1,
                  refs[2:-1], o_ref, out_cols, apply_sigmoid)
    return kernel


def _make_split_kernel(out_cols, apply_sigmoid):
    """Layer-1 input given as two (tb, K) tiles (user / item halves)."""
    def kernel(u_ref, i_ref, *refs):
        o_ref = refs[-1]
        w1u, w1i, b1 = refs[0], refs[1], refs[2]
        _mlp_body([u_ref[...].astype(jnp.bfloat16),
                   i_ref[...].astype(jnp.bfloat16)],
                  [w1u, w1i], b1, refs[3:-1], o_ref, out_cols, apply_sigmoid)
    return kernel


# ---------------------------------------------------------------------------
# host-side helpers
# ---------------------------------------------------------------------------

def _row_tiling(rows, tile_rows, target_steps=8):
    """Pick (tb, rows_p, n_steps): tb a sublane multiple dividing rows_p.

    Guarantees <= 7 pad rows and, when the row count allows, >= target_steps
    grid steps (both v7x TensorCores used, pipeline depth for DMA hiding).
    """
    rows_su = _round_up(max(int(rows), 1), SUBLANE)
    steps = max(_cdiv(rows_su, max(int(tile_rows), SUBLANE)),
                min(target_steps, rows_su // SUBLANE))
    tb = _round_up(_cdiv(rows_su, steps), SUBLANE)
    while rows_su % tb:            # terminates: tb=8 always divides rows_su
        tb -= SUBLANE
    return tb, rows_su, rows_su // tb


def _vmem_limit_bytes(tb, stream_bytes_per_row, weight_bytes):
    """Derived VMEM budget: double-buffered streamed tiles + resident weights
    (conservatively counted twice) + f32 layer-intermediate headroom."""
    need = (2 * tb * stream_bytes_per_row
            + 2 * weight_bytes
            + 8 * tb * LANE * 4
            + (2 << 20))
    return int(min(max(need, 8 << 20), 56 << 20))


def _prep_tail_params(params):
    """Pad layers 2..n to 128 lanes: bf16 weights, f32 (1, po) biases.

    Padded rows/cols/bias lanes are zero, so pad lanes stay exactly zero
    through the ReLU layers.
    """
    flat, specs = [], []
    for (w, b) in params[1:]:
        d_in, d_out = w.shape
        pi = max(LANE, _round_up(d_in, LANE))
        po = max(LANE, _round_up(d_out, LANE))
        w_p = jnp.zeros((pi, po), jnp.bfloat16).at[:d_in, :d_out].set(
            w.astype(jnp.bfloat16))
        b_p = jnp.zeros((1, po), jnp.float32).at[0, :d_out].set(
            b.astype(jnp.float32))
        flat += [w_p, b_p]
        specs += [pl.BlockSpec((pi, po), lambda i: (0, 0)),
                  pl.BlockSpec((1, po), lambda i: (0, 0))]
    return flat, specs


def _prep_layer1(w1, b1):
    d1 = w1.shape[1]
    po1 = max(LANE, _round_up(d1, LANE))
    b1_p = jnp.zeros((1, po1), jnp.float32).at[0, :d1].set(b1.astype(jnp.float32))
    return po1, d1, b1_p


# ---------------------------------------------------------------------------
# wrappers
# ---------------------------------------------------------------------------

def concat_linear_8(x, params, *, tile_rows=2048, apply_sigmoid=False):
    """concat_linear_8 forward: x (rows, in_dim) float, params = 8 (W(in,out), b).

    Returns (rows, out_dim) f32 = relu-MLP(x) (final layer without ReLU;
    sigmoid folded in if requested).
    """
    rows, in_dim = x.shape
    out_dim = params[-1][0].shape[1]
    assert params[0][0].shape[0] == in_dim

    tb, rows_p, n_steps = _row_tiling(rows, tile_rows)
    if rows_p != rows:     # <= 7 pad rows; no copy at all when rows % 8 == 0
        x = jnp.pad(x, ((0, rows_p - rows), (0, 0)))

    # layer 1: contraction dim kept at its true width (no 128-pad of K)
    w1, b1 = params[0]
    po1, d1, b1_p = _prep_layer1(w1, b1)
    w1_p = jnp.zeros((in_dim, po1), jnp.bfloat16).at[:, :d1].set(
        w1.astype(jnp.bfloat16))

    tail_flat, tail_specs = _prep_tail_params(params)

    in_specs = ([pl.BlockSpec((tb, in_dim), lambda i: (i, 0)),
                 pl.BlockSpec((in_dim, po1), lambda i: (0, 0)),
                 pl.BlockSpec((1, po1), lambda i: (0, 0))]
                + tail_specs)
    out_spec = pl.BlockSpec((tb, out_dim), lambda i: (i, 0))

    weight_bytes = sum(int(a.size) * a.dtype.itemsize
                       for a in [w1_p, b1_p] + tail_flat)
    stream_row_bytes = in_dim * x.dtype.itemsize + out_dim * 4

    out = pl.pallas_call(
        _make_rows_kernel(out_dim, apply_sigmoid),
        out_shape=jax.ShapeDtypeStruct((rows_p, out_dim), jnp.float32),
        grid=(n_steps,),
        in_specs=in_specs,
        out_specs=out_spec,
        compiler_params=pltpu.CompilerParams(
            dimension_semantics=("parallel",),
            vmem_limit_bytes=_vmem_limit_bytes(tb, stream_row_bytes, weight_bytes),
        ),
    )(x, w1_p, b1_p, *tail_flat)
    return out[:rows]


def _concat_mlp_split(x_user, x_item, params, *, tile_rows=2048,
                      apply_sigmoid=True):
    """Fused concat_linear_8 on pre-split layer-1 input halves.

    x_user/x_item: (rows, K); layer 1 = x_user @ W1[:K] + x_item @ W1[K:] + b1,
    i.e. identical to the MLP on concat([x_user, x_item], -1) without ever
    materializing the concatenated activation tensor in HBM.
    """
    rows, K = x_user.shape
    assert x_item.shape == (rows, K)
    w1, b1 = params[0]
    assert w1.shape[0] == 2 * K
    out_dim = params[-1][0].shape[1]

    tb, rows_p, n_steps = _row_tiling(rows, tile_rows)
    if rows_p != rows:
        pad = ((0, rows_p - rows), (0, 0))
        x_user = jnp.pad(x_user, pad)
        x_item = jnp.pad(x_item, pad)

    po1, d1, b1_p = _prep_layer1(w1, b1)
    w1u = jnp.zeros((K, po1), jnp.bfloat16).at[:, :d1].set(
        w1[:K].astype(jnp.bfloat16))
    w1i = jnp.zeros((K, po1), jnp.bfloat16).at[:, :d1].set(
        w1[K:].astype(jnp.bfloat16))

    tail_flat, tail_specs = _prep_tail_params(params)

    in_specs = ([pl.BlockSpec((tb, K), lambda i: (i, 0)),
                 pl.BlockSpec((tb, K), lambda i: (i, 0)),
                 pl.BlockSpec((K, po1), lambda i: (0, 0)),
                 pl.BlockSpec((K, po1), lambda i: (0, 0)),
                 pl.BlockSpec((1, po1), lambda i: (0, 0))]
                + tail_specs)
    out_spec = pl.BlockSpec((tb, out_dim), lambda i: (i, 0))

    weight_bytes = sum(int(a.size) * a.dtype.itemsize
                       for a in [w1u, w1i, b1_p] + tail_flat)
    stream_row_bytes = 2 * K * x_user.dtype.itemsize + out_dim * 4

    out = pl.pallas_call(
        _make_split_kernel(out_dim, apply_sigmoid),
        out_shape=jax.ShapeDtypeStruct((rows_p, out_dim), jnp.float32),
        grid=(n_steps,),
        in_specs=in_specs,
        out_specs=out_spec,
        compiler_params=pltpu.CompilerParams(
            dimension_semantics=("parallel",),
            vmem_limit_bytes=_vmem_limit_bytes(tb, stream_row_bytes, weight_bytes),
        ),
    )(x_user, x_item, w1u, w1i, b1_p, *tail_flat)
    return out[:rows]


def oneway_concat_forward(user_idxs, item_idxs, *,
                          user_idx_tensor, item_idx_tensor,
                          user_emb, item_emb, mlp_params, tile_rows=2048):
    """JAX/Pallas port of oneway_concat.forward.

    Embedding-table gathers stay in XLA (data-dependent, not the hot path);
    concat / permute / concat_linear_8 / mean / sigmoid all fold into one
    fused Pallas kernel over rows.
    """
    B = user_idxs.shape[0]
    E = user_emb.shape[1]

    user_neighs = jnp.take(user_idx_tensor, user_idxs, axis=0)       # (B, K)
    item_neighs = jnp.take(item_idx_tensor, item_idxs, axis=0)       # (B, K)

    # Transposed bf16 embedding tables (one small, table-sized copy) let the
    # gathers emit the (E, B, K) row-major layout the MLP rows need, so the
    # (rows x features) activation tensor is never transposed/concatenated in
    # HBM.
    # TODO(synk): in a real model, pre-transpose/cast the tables once at init.
    user_emb_t = user_emb.astype(jnp.bfloat16).T                      # (E, n_users)
    item_emb_t = item_emb.astype(jnp.bfloat16).T                      # (E, n_items)
    x_user = jnp.take(user_emb_t, user_neighs, axis=1)                # (E, B, K)
    x_item = jnp.take(item_emb_t, item_neighs, axis=1)                # (E, B, K)
    rows = E * B
    x_user = x_user.reshape(rows, -1)          # row (e*B + b) == MLP row (b, e)
    x_item = x_item.reshape(rows, -1)

    # mean over the size-1 output axis + sigmoid are folded into the kernel.
    y = _concat_mlp_split(x_user, x_item, mlp_params,
                          tile_rows=tile_rows, apply_sigmoid=True)    # (rows, 1)

    results = y.reshape(E, B).T                                       # (B, E), tiny
    return jnp.squeeze(results)


# ---------------------------------------------------------------------------
# init + pure-JAX references
# ---------------------------------------------------------------------------

def init_mlp_params(key, input_dim, output_dim):
    """nn.Linear-shaped params for concat_linear_8, stored as (in, out)."""
    dims = [input_dim, input_dim // 2, input_dim // 4, input_dim // 8,
            input_dim // 16, input_dim // 8, input_dim // 4, input_dim // 2,
            output_dim]
    params = []
    for i in range(8):
        d_in, d_out = dims[i], dims[i + 1]
        key, kw, kb = jax.random.split(key, 3)
        bound = 1.0 / (d_in ** 0.5)
        w = jax.random.uniform(kw, (d_in, d_out), jnp.float32, -bound, bound)
        b = jax.random.uniform(kb, (d_out,), jnp.float32, -bound, bound)
        params.append((w, b))
    return params


def reference_mlp(x, params):
    h = x
    for i, (w, b) in enumerate(params):
        h = h @ w + b
        if i < len(params) - 1:
            h = jnp.maximum(h, 0.0)
    return h


def reference_oneway(user_idxs, item_idxs, user_idx_tensor, item_idx_tensor,
                     user_emb, item_emb, mlp_params):
    un = user_idx_tensor[user_idxs]
    it = item_idx_tensor[item_idxs]
    ui = jnp.concatenate([user_emb[un], item_emb[it]], axis=1)
    x = jnp.transpose(ui, (0, 2, 1))
    b, e, d = x.shape
    y = reference_mlp(x.reshape(b * e, d), mlp_params).reshape(b, e, 1)
    return jnp.squeeze(jax.nn.sigmoid(jnp.mean(y, axis=2)))


if __name__ == "__main__":
    key = jax.random.PRNGKey(0)
    k_ue, k_ie, k_un, k_in, k_p, k_u, k_i, k_x = jax.random.split(key, 8)

    # small shapes consistent with the module
    multi_factor, top_k = 4, 8
    n_users, n_items = 40, 48
    emb_dim = 32
    batch = 8
    K = multi_factor * top_k                 # 32 neighbours per entity
    input_dim = multi_factor * top_k * 2     # 64
    output_dim = 1

    user_idx_tensor = jax.random.randint(k_un, (n_users, K), 0, n_users)
    item_idx_tensor = jax.random.randint(k_in, (n_items, K), 0, n_items)
    user_emb = jax.random.normal(k_ue, (n_users, emb_dim), jnp.float32)
    item_emb = jax.random.normal(k_ie, (n_items, emb_dim), jnp.float32)
    mlp_params = init_mlp_params(k_p, input_dim, output_dim)

    user_idxs = jax.random.randint(k_u, (batch,), 0, n_users)
    item_idxs = jax.random.randint(k_i, (batch,), 0, n_items)

    # 1) standalone concat_linear_8 kernel vs f32 reference (8-step grid)
    x_mlp = jax.random.normal(k_x, (256, input_dim), jnp.float32)
    y_kernel = jax.block_until_ready(concat_linear_8(x_mlp, mlp_params,
                                                     tile_rows=128))
    y_ref = reference_mlp(x_mlp, mlp_params)
    assert y_kernel.shape == (256, output_dim)
    assert jnp.allclose(y_kernel, y_ref, atol=5e-2, rtol=5e-2), "MLP mismatch"

    # 2) full oneway_concat forward (rows = emb_dim * batch = 256 -> 8-step grid)
    out = oneway_concat_forward(
        user_idxs, item_idxs,
        user_idx_tensor=user_idx_tensor, item_idx_tensor=item_idx_tensor,
        user_emb=user_emb, item_emb=item_emb, mlp_params=mlp_params)
    out = jax.block_until_ready(out)

    ref = reference_oneway(user_idxs, item_idxs, user_idx_tensor,
                           item_idx_tensor, user_emb, item_emb, mlp_params)
    assert out.shape == ref.shape == (batch, emb_dim)
    assert jnp.allclose(out, ref, atol=2e-2, rtol=2e-2), "mismatch vs reference"

    print("KERNEL_OK")
</pallas_src>

<mosaic_0001>
module attributes {stable_mosaic.version = 11 : i64} {
  func.func @kernel(%arg0: i32, %arg1: memref<32x64xf32, #tpu.memory_space<vmem>>, %arg2: memref<64x128xbf16, #tpu.memory_space<vmem>>, %arg3: memref<1x128xf32, #tpu.memory_space<vmem>>, %arg4: memref<128x128xbf16, #tpu.memory_space<vmem>>, %arg5: memref<1x128xf32, #tpu.memory_space<vmem>>, %arg6: memref<128x128xbf16, #tpu.memory_space<vmem>>, %arg7: memref<1x128xf32, #tpu.memory_space<vmem>>, %arg8: memref<128x128xbf16, #tpu.memory_space<vmem>>, %arg9: memref<1x128xf32, #tpu.memory_space<vmem>>, %arg10: memref<128x128xbf16, #tpu.memory_space<vmem>>, %arg11: memref<1x128xf32, #tpu.memory_space<vmem>>, %arg12: memref<128x128xbf16, #tpu.memory_space<vmem>>, %arg13: memref<1x128xf32, #tpu.memory_space<vmem>>, %arg14: memref<128x128xbf16, #tpu.memory_space<vmem>>, %arg15: memref<1x128xf32, #tpu.memory_space<vmem>>, %arg16: memref<128x128xbf16, #tpu.memory_space<vmem>>, %arg17: memref<1x128xf32, #tpu.memory_space<vmem>>, %arg18: memref<32x1xf32, #tpu.memory_space<vmem>>) attributes {dimension_semantics = [#tpu.dimension_semantics<parallel>], iteration_bounds = array<i64: 8>, scalar_prefetch = 0 : i64, scratch_operands = 0 : i64, tpu.core_type = #tpu.core_type<tc>, window_params = [{transform_indices = @transform_0, window_bounds = array<i64: 32, 64>}, {pipeline_mode = #tpu.pipeline_mode<synchronous>, transform_indices = @transform_1, window_bounds = array<i64: 64, 128>}, {pipeline_mode = #tpu.pipeline_mode<synchronous>, transform_indices = @transform_2, window_bounds = array<i64: 1, 128>}, {pipeline_mode = #tpu.pipeline_mode<synchronous>, transform_indices = @transform_3, window_bounds = array<i64: 128, 128>}, {pipeline_mode = #tpu.pipeline_mode<synchronous>, transform_indices = @transform_4, window_bounds = array<i64: 1, 128>}, {pipeline_mode = #tpu.pipeline_mode<synchronous>, transform_indices = @transform_5, window_bounds = array<i64: 128, 128>}, {pipeline_mode = #tpu.pipeline_mode<synchronous>, transform_indices = @transform_6, window_bounds = array<i64: 1, 128>}, {pipeline_mode = #tpu.pipeline_mode<synchronous>, transform_indices = @transform_7, window_bounds = array<i64: 128, 128>}, {pipeline_mode = #tpu.pipeline_mode<synchronous>, transform_indices = @transform_8, window_bounds = array<i64: 1, 128>}, {pipeline_mode = #tpu.pipeline_mode<synchronous>, transform_indices = @transform_9, window_bounds = array<i64: 128, 128>}, {pipeline_mode = #tpu.pipeline_mode<synchronous>, transform_indices = @transform_10, window_bounds = array<i64: 1, 128>}, {pipeline_mode = #tpu.pipeline_mode<synchronous>, transform_indices = @transform_11, window_bounds = array<i64: 128, 128>}, {pipeline_mode = #tpu.pipeline_mode<synchronous>, transform_indices = @transform_12, window_bounds = array<i64: 1, 128>}, {pipeline_mode = #tpu.pipeline_mode<synchronous>, transform_indices = @transform_13, window_bounds = array<i64: 128, 128>}, {pipeline_mode = #tpu.pipeline_mode<synchronous>, transform_indices = @transform_14, window_bounds = array<i64: 1, 128>}, {pipeline_mode = #tpu.pipeline_mode<synchronous>, transform_indices = @transform_15, window_bounds = array<i64: 128, 128>}, {pipeline_mode = #tpu.pipeline_mode<synchronous>, transform_indices = @transform_16, window_bounds = array<i64: 1, 128>}, {transform_indices = @transform_17, window_bounds = array<i64: 32, 1>}]} {
    %c0 = arith.constant 0 : index
    %c0_0 = arith.constant 0 : index
    %0 = vector.load %arg1[%c0, %c0_0] : memref<32x64xf32, #tpu.memory_space<vmem>>, vector<32x64xf32>
    %1 = arith.truncf %0 : vector<32x64xf32> to vector<32x64xbf16>
    %c0_1 = arith.constant 0 : index
    %c0_2 = arith.constant 0 : index
    %2 = vector.load %arg3[%c0_1, %c0_2] : memref<1x128xf32, #tpu.memory_space<vmem>>, vector<1x128xf32>
    %c0_3 = arith.constant 0 : index
    %c0_4 = arith.constant 0 : index
    %3 = vector.load %arg2[%c0_3, %c0_4] : memref<64x128xbf16, #tpu.memory_space<vmem>>, vector<64x128xbf16>
    %cst = arith.constant dense<0.000000e+00> : vector<32x128xf32>
    %4 = tpu.matmul %1, %3, %cst {dimension_numbers = #tpu.dot_dimension_numbers<[1], [0], [0], [1], [0, 0, 1, 1], [], []>} : vector<32x64xbf16>, vector<64x128xbf16>, vector<32x128xf32> -> vector<32x128xf32>
    %5 = vector.broadcast %2 : vector<1x128xf32> to vector<32x128xf32>
    %6 = arith.addf %5, %4 : vector<32x128xf32>
    %cst_5 = arith.constant 0.000000e+00 : f32
    %7 = vector.broadcast %cst_5 : f32 to vector<32x128xf32>
    %8 = arith.maximumf %6, %7 : vector<32x128xf32>
    %9 = arith.truncf %8 : vector<32x128xf32> to vector<32x128xbf16>
    %c0_6 = arith.constant 0 : index
    %c0_7 = arith.constant 0 : index
    %10 = vector.load %arg4[%c0_6, %c0_7] : memref<128x128xbf16, #tpu.memory_space<vmem>>, vector<128x128xbf16>
    %cst_8 = arith.constant dense<0.000000e+00> : vector<32x128xf32>
    %11 = tpu.matmul %9, %10, %cst_8 {dimension_numbers = #tpu.dot_dimension_numbers<[1], [0], [0], [1], [0, 0, 1, 1], [], []>} : vector<32x128xbf16>, vector<128x128xbf16>, vector<32x128xf32> -> vector<32x128xf32>
    %c0_9 = arith.constant 0 : index
    %c0_10 = arith.constant 0 : index
    %12 = vector.load %arg5[%c0_9, %c0_10] : memref<1x128xf32, #tpu.memory_space<vmem>>, vector<1x128xf32>
    %13 = vector.broadcast %12 : vector<1x128xf32> to vector<32x128xf32>
    %14 = arith.addf %11, %13 : vector<32x128xf32>
    %cst_11 = arith.constant 0.000000e+00 : f32
    %15 = vector.broadcast %cst_11 : f32 to vector<32x128xf32>
    %16 = arith.maximumf %14, %15 : vector<32x128xf32>
    %17 = arith.truncf %16 : vector<32x128xf32> to vector<32x128xbf16>
    %c0_12 = arith.constant 0 : index
    %c0_13 = arith.constant 0 : index
    %18 = vector.load %arg6[%c0_12, %c0_13] : memref<128x128xbf16, #tpu.memory_space<vmem>>, vector<128x128xbf16>
    %cst_14 = arith.constant dense<0.000000e+00> : vector<32x128xf32>
    %19 = tpu.matmul %17, %18, %cst_14 {dimension_numbers = #tpu.dot_dimension_numbers<[1], [0], [0], [1], [0, 0, 1, 1], [], []>} : vector<32x128xbf16>, vector<128x128xbf16>, vector<32x128xf32> -> vector<32x128xf32>
    %c0_15 = arith.constant 0 : index
    %c0_16 = arith.constant 0 : index
    %20 = vector.load %arg7[%c0_15, %c0_16] : memref<1x128xf32, #tpu.memory_space<vmem>>, vector<1x128xf32>
    %21 = vector.broadcast %20 : vector<1x128xf32> to vector<32x128xf32>
    %22 = arith.addf %19, %21 : vector<32x128xf32>
    %cst_17 = arith.constant 0.000000e+00 : f32
    %23 = vector.broadcast %cst_17 : f32 to vector<32x128xf32>
    %24 = arith.maximumf %22, %23 : vector<32x128xf32>
    %25 = arith.truncf %24 : vector<32x128xf32> to vector<32x128xbf16>
    %c0_18 = arith.constant 0 : index
    %c0_19 = arith.constant 0 : index
    %26 = vector.load %arg8[%c0_18, %c0_19] : memref<128x128xbf16, #tpu.memory_space<vmem>>, vector<128x128xbf16>
    %cst_20 = arith.constant dense<0.000000e+00> : vector<32x128xf32>
    %27 = tpu.matmul %25, %26, %cst_20 {dimension_numbers = #tpu.dot_dimension_numbers<[1], [0], [0], [1], [0, 0, 1, 1], [], []>} : vector<32x128xbf16>, vector<128x128xbf16>, vector<32x128xf32> -> vector<32x128xf32>
    %c0_21 = arith.constant 0 : index
    %c0_22 = arith.constant 0 : index
    %28 = vector.load %arg9[%c0_21, %c0_22] : memref<1x128xf32, #tpu.memory_space<vmem>>, vector<1x128xf32>
    %29 = vector.broadcast %28 : vector<1x128xf32> to vector<32x128xf32>
    %30 = arith.addf %27, %29 : vector<32x128xf32>
    %cst_23 = arith.constant 0.000000e+00 : f32
    %31 = vector.broadcast %cst_23 : f32 to vector<32x128xf32>
    %32 = arith.maximumf %30, %31 : vector<32x128xf32>
    %33 = arith.truncf %32 : vector<32x128xf32> to vector<32x128xbf16>
    %c0_24 = arith.constant 0 : index
    %c0_25 = arith.constant 0 : index
    %34 = vector.load %arg10[%c0_24, %c0_25] : memref<128x128xbf16, #tpu.memory_space<vmem>>, vector<128x128xbf16>
    %cst_26 = arith.constant dense<0.000000e+00> : vector<32x128xf32>
    %35 = tpu.matmul %33, %34, %cst_26 {dimension_numbers = #tpu.dot_dimension_numbers<[1], [0], [0], [1], [0, 0, 1, 1], [], []>} : vector<32x128xbf16>, vector<128x128xbf16>, vector<32x128xf32> -> vector<32x128xf32>
    %c0_27 = arith.constant 0 : index
    %c0_28 = arith.constant 0 : index
    %36 = vector.load %arg11[%c0_27, %c0_28] : memref<1x128xf32, #tpu.memory_space<vmem>>, vector<1x128xf32>
    %37 = vector.broadcast %36 : vector<1x128xf32> to vector<32x128xf32>
    %38 = arith.addf %35, %37 : vector<32x128xf32>
    %cst_29 = arith.constant 0.000000e+00 : f32
    %39 = vector.broadcast %cst_29 : f32 to vector<32x128xf32>
    %40 = arith.maximumf %38, %39 : vector<32x128xf32>
    %41 = arith.truncf %40 : vector<32x128xf32> to vector<32x128xbf16>
    %c0_30 = arith.constant 0 : index
    %c0_31 = arith.constant 0 : index
    %42 = vector.load %arg12[%c0_30, %c0_31] : memref<128x128xbf16, #tpu.memory_space<vmem>>, vector<128x128xbf16>
    %cst_32 = arith.constant dense<0.000000e+00> : vector<32x128xf32>
    %43 = tpu.matmul %41, %42, %cst_32 {dimension_numbers = #tpu.dot_dimension_numbers<[1], [0], [0], [1], [0, 0, 1, 1], [], []>} : vector<32x128xbf16>, vector<128x128xbf16>, vector<32x128xf32> -> vector<32x128xf32>
    %c0_33 = arith.constant 0 : index
    %c0_34 = arith.constant 0 : index
    %44 = vector.load %arg13[%c0_33, %c0_34] : memref<1x128xf32, #tpu.memory_space<vmem>>, vector<1x128xf32>
    %45 = vector.broadcast %44 : vector<1x128xf32> to vector<32x128xf32>
    %46 = arith.addf %43, %45 : vector<32x128xf32>
    %cst_35 = arith.constant 0.000000e+00 : f32
    %47 = vector.broadcast %cst_35 : f32 to vector<32x128xf32>
    %48 = arith.maximumf %46, %47 : vector<32x128xf32>
    %49 = arith.truncf %48 : vector<32x128xf32> to vector<32x128xbf16>
    %c0_36 = arith.constant 0 : index
    %c0_37 = arith.constant 0 : index
    %50 = vector.load %arg14[%c0_36, %c0_37] : memref<128x128xbf16, #tpu.memory_space<vmem>>, vector<128x128xbf16>
    %cst_38 = arith.constant dense<0.000000e+00> : vector<32x128xf32>
    %51 = tpu.matmul %49, %50, %cst_38 {dimension_numbers = #tpu.dot_dimension_numbers<[1], [0], [0], [1], [0, 0, 1, 1], [], []>} : vector<32x128xbf16>, vector<128x128xbf16>, vector<32x128xf32> -> vector<32x128xf32>
    %c0_39 = arith.constant 0 : index
    %c0_40 = arith.constant 0 : index
    %52 = vector.load %arg15[%c0_39, %c0_40] : memref<1x128xf32, #tpu.memory_space<vmem>>, vector<1x128xf32>
    %53 = vector.broadcast %52 : vector<1x128xf32> to vector<32x128xf32>
    %54 = arith.addf %51, %53 : vector<32x128xf32>
    %cst_41 = arith.constant 0.000000e+00 : f32
    %55 = vector.broadcast %cst_41 : f32 to vector<32x128xf32>
    %56 = arith.maximumf %54, %55 : vector<32x128xf32>
    %57 = arith.truncf %56 : vector<32x128xf32> to vector<32x128xbf16>
    %c0_42 = arith.constant 0 : index
    %c0_43 = arith.constant 0 : index
    %58 = vector.load %arg16[%c0_42, %c0_43] : memref<128x128xbf16, #tpu.memory_space<vmem>>, vector<128x128xbf16>
    %cst_44 = arith.constant dense<0.000000e+00> : vector<32x128xf32>
    %59 = tpu.matmul %57, %58, %cst_44 {dimension_numbers = #tpu.dot_dimension_numbers<[1], [0], [0], [1], [0, 0, 1, 1], [], []>} : vector<32x128xbf16>, vector<128x128xbf16>, vector<32x128xf32> -> vector<32x128xf32>
    %c0_45 = arith.constant 0 : index
    %c0_46 = arith.constant 0 : index
    %60 = vector.load %arg17[%c0_45, %c0_46] : memref<1x128xf32, #tpu.memory_space<vmem>>, vector<1x128xf32>
    %61 = vector.broadcast %60 : vector<1x128xf32> to vector<32x128xf32>
    %62 = arith.addf %59, %61 : vector<32x128xf32>
    %63 = vector.extract_strided_slice %62 {offsets = [0, 0], sizes = [32, 1], strides = [1, 1]} : vector<32x128xf32> to vector<32x1xf32>
    %c0_47 = arith.constant 0 : index
    %c0_48 = arith.constant 0 : index
    %64 = vector.load %arg18[%c0_47, %c0_48] : memref<32x1xf32, #tpu.memory_space<vmem>>, vector<32x1xf32>
    tpu.vector_store %arg18[%c0_47, %c0_48], %63 {strides = array<i32>} : memref<32x1xf32, #tpu.memory_space<vmem>>, vector<32x1xf32>,
    return
  }
  func.func @transform_0(%arg0: i32) -> (i32, i32) {
    %c0_i32 = arith.constant 0 : i32
    %c0_i32_0 = arith.constant 0 : i32
    return %arg0, %c0_i32 : i32, i32
  }
  func.func @transform_1(%arg0: i32) -> (i32, i32) {
    %c0_i32 = arith.constant 0 : i32
    %c0_i32_0 = arith.constant 0 : i32
    %c0_i32_1 = arith.constant 0 : i32
    return %c0_i32, %c0_i32_0 : i32, i32
  }
  func.func @transform_2(%arg0: i32) -> (i32, i32) {
    %c0_i32 = arith.constant 0 : i32
    %c0_i32_0 = arith.constant 0 : i32
    %c0_i32_1 = arith.constant 0 : i32
    return %c0_i32, %c0_i32_0 : i32, i32
  }
  func.func @transform_3(%arg0: i32) -> (i32, i32) {
    %c0_i32 = arith.constant 0 : i32
    %c0_i32_0 = arith.constant 0 : i32
    %c0_i32_1 = arith.constant 0 : i32
    return %c0_i32, %c0_i32_0 : i32, i32
  }
  func.func @transform_4(%arg0: i32) -> (i32, i32) {
    %c0_i32 = arith.constant 0 : i32
    %c0_i32_0 = arith.constant 0 : i32
    %c0_i32_1 = arith.constant 0 : i32
    return %c0_i32, %c0_i32_0 : i32, i32
  }
  func.func @transform_5(%arg0: i32) -> (i32, i32) {
    %c0_i32 = arith.constant 0 : i32
    %c0_i32_0 = arith.constant 0 : i32
    %c0_i32_1 = arith.constant 0 : i32
    return %c0_i32, %c0_i32_0 : i32, i32
  }
  func.func @transform_6(%arg0: i32) -> (i32, i32) {
    %c0_i32 = arith.constant 0 : i32
    %c0_i32_0 = arith.constant 0 : i32
    %c0_i32_1 = arith.constant 0 : i32
    return %c0_i32, %c0_i32_0 : i32, i32
  }
  func.func @transform_7(%arg0: i32) -> (i32, i32) {
    %c0_i32 = arith.constant 0 : i32
    %c0_i32_0 = arith.constant 0 : i32
    %c0_i32_1 = arith.constant 0 : i32
    return %c0_i32, %c0_i32_0 : i32, i32
  }
  func.func @transform_8(%arg0: i32) -> (i32, i32) {
    %c0_i32 = arith.constant 0 : i32
    %c0_i32_0 = arith.constant 0 : i32
    %c0_i32_1 = arith.constant 0 : i32
    return %c0_i32, %c0_i32_0 : i32, i32
  }
  func.func @transform_9(%arg0: i32) -> (i32, i32) {
    %c0_i32 = arith.constant 0 : i32
    %c0_i32_0 = arith.constant 0 : i32
    %c0_i32_1 = arith.constant 0 : i32
    return %c0_i32, %c0_i32_0 : i32, i32
  }
  func.func @transform_10(%arg0: i32) -> (i32, i32) {
    %c0_i32 = arith.constant 0 : i32
    %c0_i32_0 = arith.constant 0 : i32
    %c0_i32_1 = arith.constant 0 : i32
    return %c0_i32, %c0_i32_0 : i32, i32
  }
  func.func @transform_11(%arg0: i32) -> (i32, i32) {
    %c0_i32 = arith.constant 0 : i32
    %c0_i32_0 = arith.constant 0 : i32
    %c0_i32_1 = arith.constant 0 : i32
    return %c0_i32, %c0_i32_0 : i32, i32
  }
  func.func @transform_12(%arg0: i32) -> (i32, i32) {
    %c0_i32 = arith.constant 0 : i32
    %c0_i32_0 = arith.constant 0 : i32
    %c0_i32_1 = arith.constant 0 : i32
    return %c0_i32, %c0_i32_0 : i32, i32
  }
  func.func @transform_13(%arg0: i32) -> (i32, i32) {
    %c0_i32 = arith.constant 0 : i32
    %c0_i32_0 = arith.constant 0 : i32
    %c0_i32_1 = arith.constant 0 : i32
    return %c0_i32, %c0_i32_0 : i32, i32
  }
  func.func @transform_14(%arg0: i32) -> (i32, i32) {
    %c0_i32 = arith.constant 0 : i32
    %c0_i32_0 = arith.constant 0 : i32
    %c0_i32_1 = arith.constant 0 : i32
    return %c0_i32, %c0_i32_0 : i32, i32
  }
  func.func @transform_15(%arg0: i32) -> (i32, i32) {
    %c0_i32 = arith.constant 0 : i32
    %c0_i32_0 = arith.constant 0 : i32
    %c0_i32_1 = arith.constant 0 : i32
    return %c0_i32, %c0_i32_0 : i32, i32
  }
  func.func @transform_16(%arg0: i32) -> (i32, i32) {
    %c0_i32 = arith.constant 0 : i32
    %c0_i32_0 = arith.constant 0 : i32
    %c0_i32_1 = arith.constant 0 : i32
    return %c0_i32, %c0_i32_0 : i32, i32
  }
  func.func @transform_17(%arg0: i32) -> (i32, i32) {
    %c0_i32 = arith.constant 0 : i32
    %c0_i32_0 = arith.constant 0 : i32
    return %arg0, %c0_i32 : i32, i32
  }
}

</mosaic_0001>

<llo_original>
// kernel: tpu_custom_call.1
$region0: #{tpu_custom_call.1}
  #allocation0 [shape = 'u32[]', space=smem, size = 0x4, offset = 0x4, fixed_abs, tag = 'smem constant byte address 0x4 - core index']
  #allocation1 [shape = 'u32[72,128]{1,0:T(1,128)}', space=vmem, size = 0x9000, scoped, tag = 'internal scratch']
  %s0 = inlined_call_operand.vmem [shape: f32[256,64], index: 0, kind: input, shape index: {}]
  %s1 = inlined_call_operand.hbm [shape: bf16[64,128], index: 1, kind: input, shape index: {}]
  %s2 = inlined_call_operand.hbm [shape: f32[1,128], index: 2, kind: input, shape index: {}]
  %s3 = inlined_call_operand.vmem [shape: bf16[128,128], index: 3, kind: input, shape index: {}]
  %s4 = inlined_call_operand.hbm [shape: f32[1,128], index: 4, kind: input, shape index: {}]
  %s5 = inlined_call_operand.vmem [shape: bf16[128,128], index: 5, kind: input, shape index: {}]
  %s6 = inlined_call_operand.vmem [shape: f32[1,128], index: 6, kind: input, shape index: {}]
  %s7 = inlined_call_operand.vmem [shape: bf16[128,128], index: 7, kind: input, shape index: {}]
  %s8 = inlined_call_operand.vmem [shape: f32[1,128], index: 8, kind: input, shape index: {}]
  %s9 = inlined_call_operand.vmem [shape: bf16[128,128], index: 9, kind: input, shape index: {}]
  %s10 = inlined_call_operand.vmem [shape: f32[1,128], index: 10, kind: input, shape index: {}]
  %s11 = inlined_call_operand.vmem [shape: bf16[128,128], index: 11, kind: input, shape index: {}]
  %s12 = inlined_call_operand.vmem [shape: f32[1,128], index: 12, kind: input, shape index: {}]
  %s13 = inlined_call_operand.vmem [shape: bf16[128,128], index: 13, kind: input, shape index: {}]
  %s14 = inlined_call_operand.vmem [shape: f32[1,128], index: 14, kind: input, shape index: {}]
  %s15 = inlined_call_operand.hbm [shape: bf16[128,128], index: 15, kind: input, shape index: {}]
  %s16 = inlined_call_operand.vmem [shape: f32[1,128], index: 16, kind: input, shape index: {}]
  %s17 = inlined_call_operand.vmem [shape: f32[256,1], index: 17, kind: output, shape index: {}]
  %s18 = sld [smem:[#allocation0]]
  $region117: #{tpu_custom_call.1} parent=0
    _
  %s20 = ssub.s32 1, %s18
  %s21 = scalar_select 0, %s20, %s18
  $region1: #{tpu_custom_call.1} parent=0
    #allocation2 [shape = 'u8[16384]{0}', space=vmem, size = 0x4000, scoped, tag = 'input window, operand 1, single buffered']
    #allocation3 [shape = 's32[2]{0}', space=sflag, size = 0x8, scoped, tag = 'scoped memory for tpu_custom_call.1']
    #allocation4 [shape = 'u8[512]{0}', space=vmem, size = 0x400, scoped, tag = 'input window, operand 2, single buffered']
    #allocation5 [shape = 's32[1]{0}', space=sflag, size = 0x4, scoped, tag = 'scoped memory for tpu_custom_call.1']
    #allocation6 [shape = 'u8[512]{0}', space=vmem, size = 0x400, scoped, tag = 'input window, operand 4, single buffered']
    #allocation7 [shape = 'u8[32768]{0}', space=vmem, size = 0x8000, scoped, tag = 'input window, operand 15, single buffered']
    #allocation8 [shape = 's32[1]{0}', space=sflag, size = 0x4, scoped, tag = 'scoped memory for tpu_custom_call.1']
    %22 = vsyncpa [#allocation3], 0
    %23 = vsyncpa [#allocation5], 0
    %24 = vsyncpa [#allocation8], 0
    loop: start=0, step=1, limit=10
    $region2: #{tpu_custom_call.1} parent=1 // loop_pre_header
      _
    $region3: #{tpu_custom_call.1} parent=1 // loop_header
      %s26 = sphi 0, %s30
      %p27 = scmp.ge.s32.totalorder %s26, 10
      %s36 = sphi 0, %s38
      %s39 = sphi 0, %s36
      %s40 = sphi 0, %s39
      %s56 = sphi 0, %s40
      %s60 = sphi 0, %s60
      %s62 = sphi 0, %s60
      %s63 = sphi 0, %s62
      %s77 = sphi 0, %s63
      %s81 = sphi 0, %s81
      %s83 = sphi 0, %s81
      %s84 = sphi 0, %s83
      %s98 = sphi 0, %s84
      %s102 = sphi 0, %s102
      %s104 = sphi 0, %s102
      %s105 = sphi 0, %s104
      %s119 = sphi 0, %s105
      %s123 = sphi 0, %s123
      %s125 = sphi 0, %s123
      %s126 = sphi 0, %s125
      %s140 = sphi 0, %s126
      %s144 = sphi 0, %s144
      %s146 = sphi 0, %s144
      %s147 = sphi 0, %s146
      %s161 = sphi 0, %s147
      %s165 = sphi 0, %s165
      %s167 = sphi 0, %s165
      %s168 = sphi 0, %s167
      %s182 = sphi 0, %s168
      %s186 = sphi 0, %s186
      %s188 = sphi 0, %s186
      %s189 = sphi 0, %s188
      %s203 = sphi 0, %s189
      %s207 = sphi 0, %s207
      %s209 = sphi 0, %s207
      %s210 = sphi 0, %s209
      %s224 = sphi 0, %s210
      %s228 = sphi 0, %s228
      %s230 = sphi 0, %s228
      %s231 = sphi 0, %s230
      %s245 = sphi 0, %s231
      %s249 = sphi 0, %s249
      %s251 = sphi 0, %s249
      %s252 = sphi 0, %s251
      %s266 = sphi 0, %s252
      %s270 = sphi 0, %s270
      %s272 = sphi 0, %s270
      %s273 = sphi 0, %s272
      %s287 = sphi 0, %s273
      %s291 = sphi 0, %s291
      %s293 = sphi 0, %s291
      %s294 = sphi 0, %s293
      %s308 = sphi 0, %s294
      %s312 = sphi 0, %s312
      %s314 = sphi 0, %s312
      %s315 = sphi 0, %s314
      %s329 = sphi 0, %s315
      %s333 = sphi 0, %s333
      %s335 = sphi 0, %s333
      %s336 = sphi 0, %s335
      %s350 = sphi 0, %s336
      %s354 = sphi 0, %s354
      %s356 = sphi 0, %s354
      %s357 = sphi 0, %s356
      %s371 = sphi 0, %s357
      %s375 = sphi 0, %s375
      %s377 = sphi 0, %s375
      %s378 = sphi 0, %s377
      %s392 = sphi 0, %s378
      %s398 = sphi 0, %s400
      %s401 = sphi 0, %s398
      %s402 = sphi 0, %s401
      %s418 = sphi 0, %s402
    $region4: #{tpu_custom_call.1} parent=1 // loop_header_branch
      %29 = sbr.rel (%p27) target = $region8
    $region5: #{tpu_custom_call.1} parent=1 // loop_body
      %s31 = ssub.s32 %s26, 1
      %s32 = ssub.s32 %s26, 2
      %s33 = sadd.s32 %s26, 1
      %s34 = ssub.s32 %s26, %s33
      %p35 = scmp.eq.s32.totalorder %s34, 0
      %s37 = sadd.s32 %s36, 1
      %s38 = scalar_select %p35, %s36, %s37
      %p41 = pneg %p35
      %p42 = scmp.eq.s32.totalorder %s26, 7
      %p43 = por %p41, %p42
      %p44 = scmp.ne.s32.totalorder %s36, %s39
      %p45 = scmp.eq.s32.totalorder %s26, 0
      %p46 = por %p44, %p45
      %p47 = scmp.ne.s32.totalorder %s36, %s39
      %p48 = scmp.eq.s32.totalorder %s31, 7
      %p49 = por %p47, %p48
      %p50 = scmp.ne.s32.totalorder %s39, %s40
      %p51 = scmp.eq.s32.totalorder %s31, 0
      %p52 = por %p50, %p51
      %p53 = scmp.ne.s32.totalorder %s39, %s40
      %p54 = scmp.eq.s32.totalorder %s32, 7
      %p55 = por %p53, %p54
      %p57 = scmp.ne.s32.totalorder %s40, %s56
      %p58 = scmp.eq.s32.totalorder %s32, 0
      %p59 = por %p57, %p58
      %s61 = sadd.s32 %s60, 1
      %p64 = scmp.eq.s32.totalorder %s26, 7
      %p65 = scmp.ne.s32.totalorder %s60, %s62
      %p66 = scmp.eq.s32.totalorder %s26, 0
      %p67 = por %p65, %p66
      %p68 = scmp.ne.s32.totalorder %s60, %s62
      %p69 = scmp.eq.s32.totalorder %s31, 7
      %p70 = por %p68, %p69
      %p71 = scmp.ne.s32.totalorder %s62, %s63
      %p72 = scmp.eq.s32.totalorder %s31, 0
      %p73 = por %p71, %p72
      %p74 = scmp.ne.s32.totalorder %s62, %s63
      %p75 = scmp.eq.s32.totalorder %s32, 7
      %p76 = por %p74, %p75
      %p78 = scmp.ne.s32.totalorder %s63, %s77
      %p79 = scmp.eq.s32.totalorder %s32, 0
      %p80 = por %p78, %p79
      %s82 = sadd.s32 %s81, 1
      %p85 = scmp.eq.s32.totalorder %s26, 7
      %p86 = scmp.ne.s32.totalorder %s81, %s83
      %p87 = scmp.eq.s32.totalorder %s26, 0
      %p88 = por %p86, %p87
      %p89 = scmp.ne.s32.totalorder %s81, %s83
      %p90 = scmp.eq.s32.totalorder %s31, 7
      %p91 = por %p89, %p90
      %p92 = scmp.ne.s32.totalorder %s83, %s84
      %p93 = scmp.eq.s32.totalorder %s31, 0
      %p94 = por %p92, %p93
      %p95 = scmp.ne.s32.totalorder %s83, %s84
      %p96 = scmp.eq.s32.totalorder %s32, 7
      %p97 = por %p95, %p96
      %p99 = scmp.ne.s32.totalorder %s84, %s98
      %p100 = scmp.eq.s32.totalorder %s32, 0
      %p101 = por %p99, %p100
      %s103 = sadd.s32 %s102, 1
      %p106 = scmp.eq.s32.totalorder %s26, 7
      %p107 = scmp.ne.s32.totalorder %s102, %s104
      %p108 = scmp.eq.s32.totalorder %s26, 0
      %p109 = por %p107, %p108
      %p110 = scmp.ne.s32.totalorder %s102, %s104
      %p111 = scmp.eq.s32.totalorder %s31, 7
      %p112 = por %p110, %p111
      %p113 = scmp.ne.s32.totalorder %s104, %s105
      %p114 = scmp.eq.s32.totalorder %s31, 0
      %p115 = por %p113, %p114
      %p116 = scmp.ne.s32.totalorder %s104, %s105
      %p117 = scmp.eq.s32.totalorder %s32, 7
      %p118 = por %p116, %p117
      %p120 = scmp.ne.s32.totalorder %s105, %s119
      %p121 = scmp.eq.s32.totalorder %s32, 0
      %p122 = por %p120, %p121
      %s124 = sadd.s32 %s123, 1
      %p127 = scmp.eq.s32.totalorder %s26, 7
      %p128 = scmp.ne.s32.totalorder %s123, %s125
      %p129 = scmp.eq.s32.totalorder %s26, 0
      %p130 = por %p128, %p129
      %p131 = scmp.ne.s32.totalorder %s123, %s125
      %p132 = scmp.eq.s32.totalorder %s31, 7
      %p133 = por %p131, %p132
      %p134 = scmp.ne.s32.totalorder %s125, %s126
      %p135 = scmp.eq.s32.totalorder %s31, 0
      %p136 = por %p134, %p135
      %p137 = scmp.ne.s32.totalorder %s125, %s126
      %p138 = scmp.eq.s32.totalorder %s32, 7
      %p139 = por %p137, %p138
      %p141 = scmp.ne.s32.totalorder %s126, %s140
      %p142 = scmp.eq.s32.totalorder %s32, 0
      %p143 = por %p141, %p142
      %s145 = sadd.s32 %s144, 1
      %p148 = scmp.eq.s32.totalorder %s26, 7
      %p149 = scmp.ne.s32.totalorder %s144, %s146
      %p150 = scmp.eq.s32.totalorder %s26, 0
      %p151 = por %p149, %p150
      %p152 = scmp.ne.s32.totalorder %s144, %s146
      %p153 = scmp.eq.s32.totalorder %s31, 7
      %p154 = por %p152, %p153
      %p155 = scmp.ne.s32.totalorder %s146, %s147
      %p156 = scmp.eq.s32.totalorder %s31, 0
      %p157 = por %p155, %p156
      %p158 = scmp.ne.s32.totalorder %s146, %s147
      %p159 = scmp.eq.s32.totalorder %s32, 7
      %p160 = por %p158, %p159
      %p162 = scmp.ne.s32.totalorder %s147, %s161
      %p163 = scmp.eq.s32.totalorder %s32, 0
      %p164 = por %p162, %p163
      %s166 = sadd.s32 %s165, 1
      %p169 = scmp.eq.s32.totalorder %s26, 7
      %p170 = scmp.ne.s32.totalorder %s165, %s167
      %p171 = scmp.eq.s32.totalorder %s26, 0
      %p172 = por %p170, %p171
      %p173 = scmp.ne.s32.totalorder %s165, %s167
      %p174 = scmp.eq.s32.totalorder %s31, 7
      %p175 = por %p173, %p174
      %p176 = scmp.ne.s32.totalorder %s167, %s168
      %p177 = scmp.eq.s32.totalorder %s31, 0
      %p178 = por %p176, %p177
      %p179 = scmp.ne.s32.totalorder %s167, %s168
      %p180 = scmp.eq.s32.totalorder %s32, 7
      %p181 = por %p179, %p180
      %p183 = scmp.ne.s32.totalorder %s168, %s182
      %p184 = scmp.eq.s32.totalorder %s32, 0
      %p185 = por %p183, %p184
      %s187 = sadd.s32 %s186, 1
      %p190 = scmp.eq.s32.totalorder %s26, 7
      %p191 = scmp.ne.s32.totalorder %s186, %s188
      %p192 = scmp.eq.s32.totalorder %s26, 0
      %p193 = por %p191, %p192
      %p194 = scmp.ne.s32.totalorder %s186, %s188
      %p195 = scmp.eq.s32.totalorder %s31, 7
      %p196 = por %p194, %p195
      %p197 = scmp.ne.s32.totalorder %s188, %s189
      %p198 = scmp.eq.s32.totalorder %s31, 0
      %p199 = por %p197, %p198
      %p200 = scmp.ne.s32.totalorder %s188, %s189
      %p201 = scmp.eq.s32.totalorder %s32, 7
      %p202 = por %p200, %p201
      %p204 = scmp.ne.s32.totalorder %s189, %s203
      %p205 = scmp.eq.s32.totalorder %s32, 0
      %p206 = por %p204, %p205
      %s208 = sadd.s32 %s207, 1
      %p211 = scmp.eq.s32.totalorder %s26, 7
      %p212 = scmp.ne.s32.totalorder %s207, %s209
      %p213 = scmp.eq.s32.totalorder %s26, 0
      %p214 = por %p212, %p213
      %p215 = scmp.ne.s32.totalorder %s207, %s209
      %p216 = scmp.eq.s32.totalorder %s31, 7
      %p217 = por %p215, %p216
      %p218 = scmp.ne.s32.totalorder %s209, %s210
      %p219 = scmp.eq.s32.totalorder %s31, 0
      %p220 = por %p218, %p219
      %p221 = scmp.ne.s32.totalorder %s209, %s210
      %p222 = scmp.eq.s32.totalorder %s32, 7
      %p223 = por %p221, %p222
      %p225 = scmp.ne.s32.totalorder %s210, %s224
      %p226 = scmp.eq.s32.totalorder %s32, 0
      %p227 = por %p225, %p226
      %s229 = sadd.s32 %s228, 1
      %p232 = scmp.eq.s32.totalorder %s26, 7
      %p233 = scmp.ne.s32.totalorder %s228, %s230
      %p234 = scmp.eq.s32.totalorder %s26, 0
      %p235 = por %p233, %p234
      %p236 = scmp.ne.s32.totalorder %s228, %s230
      %p237 = scmp.eq.s32.totalorder %s31, 7
      %p238 = por %p236, %p237
      %p239 = scmp.ne.s32.totalorder %s230, %s231
      %p240 = scmp.eq.s32.totalorder %s31, 0
      %p241 = por %p239, %p240
      %p242 = scmp.ne.s32.totalorder %s230, %s231
      %p243 = scmp.eq.s32.totalorder %s32, 7
      %p244 = por %p242, %p243
      %p246 = scmp.ne.s32.totalorder %s231, %s245
      %p247 = scmp.eq.s32.totalorder %s32, 0
      %p248 = por %p246, %p247
      %s250 = sadd.s32 %s249, 1
      %p253 = scmp.eq.s32.totalorder %s26, 7
      %p254 = scmp.ne.s32.totalorder %s249, %s251
      %p255 = scmp.eq.s32.totalorder %s26, 0
      %p256 = por %p254, %p255
      %p257 = scmp.ne.s32.totalorder %s249, %s251
      %p258 = scmp.eq.s32.totalorder %s31, 7
      %p259 = por %p257, %p258
      %p260 = scmp.ne.s32.totalorder %s251, %s252
      %p261 = scmp.eq.s32.totalorder %s31, 0
      %p262 = por %p260, %p261
      %p263 = scmp.ne.s32.totalorder %s251, %s252
      %p264 = scmp.eq.s32.totalorder %s32, 7
      %p265 = por %p263, %p264
      %p267 = scmp.ne.s32.totalorder %s252, %s266
      %p268 = scmp.eq.s32.totalorder %s32, 0
      %p269 = por %p267, %p268
      %s271 = sadd.s32 %s270, 1
      %p274 = scmp.eq.s32.totalorder %s26, 7
      %p275 = scmp.ne.s32.totalorder %s270, %s272
      %p276 = scmp.eq.s32.totalorder %s26, 0
      %p277 = por %p275, %p276
      %p278 = scmp.ne.s32.totalorder %s270, %s272
      %p279 = scmp.eq.s32.totalorder %s31, 7
      %p280 = por %p278, %p279
      %p281 = scmp.ne.s32.totalorder %s272, %s273
      %p282 = scmp.eq.s32.totalorder %s31, 0
      %p283 = por %p281, %p282
      %p284 = scmp.ne.s32.totalorder %s272, %s273
      %p285 = scmp.eq.s32.totalorder %s32, 7
      %p286 = por %p284, %p285
      %p288 = scmp.ne.s32.totalorder %s273, %s287
      %p289 = scmp.eq.s32.totalorder %s32, 0
      %p290 = por %p288, %p289
      %s292 = sadd.s32 %s291, 1
      %p295 = scmp.eq.s32.totalorder %s26, 7
      %p296 = scmp.ne.s32.totalorder %s291, %s293
      %p297 = scmp.eq.s32.totalorder %s26, 0
      %p298 = por %p296, %p297
      %p299 = scmp.ne.s32.totalorder %s291, %s293
      %p300 = scmp.eq.s32.totalorder %s31, 7
      %p301 = por %p299, %p300
      %p302 = scmp.ne.s32.totalorder %s293, %s294
      %p303 = scmp.eq.s32.totalorder %s31, 0
      %p304 = por %p302, %p303
      %p305 = scmp.ne.s32.totalorder %s293, %s294
      %p306 = scmp.eq.s32.totalorder %s32, 7
      %p307 = por %p305, %p306
      %p309 = scmp.ne.s32.totalorder %s294, %s308
      %p310 = scmp.eq.s32.totalorder %s32, 0
      %p311 = por %p309, %p310
      %s313 = sadd.s32 %s312, 1
      %p316 = scmp.eq.s32.totalorder %s26, 7
      %p317 = scmp.ne.s32.totalorder %s312, %s314
      %p318 = scmp.eq.s32.totalorder %s26, 0
      %p319 = por %p317, %p318
      %p320 = scmp.ne.s32.totalorder %s312, %s314
      %p321 = scmp.eq.s32.totalorder %s31, 7
      %p322 = por %p320, %p321
      %p323 = scmp.ne.s32.totalorder %s314, %s315
      %p324 = scmp.eq.s32.totalorder %s31, 0
      %p325 = por %p323, %p324
      %p326 = scmp.ne.s32.totalorder %s314, %s315
      %p327 = scmp.eq.s32.totalorder %s32, 7
      %p328 = por %p326, %p327
      %p330 = scmp.ne.s32.totalorder %s315, %s329
      %p331 = scmp.eq.s32.totalorder %s32, 0
      %p332 = por %p330, %p331
      %s334 = sadd.s32 %s333, 1
      %p337 = scmp.eq.s32.totalorder %s26, 7
      %p338 = scmp.ne.s32.totalorder %s333, %s335
      %p339 = scmp.eq.s32.totalorder %s26, 0
      %p340 = por %p338, %p339
      %p341 = scmp.ne.s32.totalorder %s333, %s335
      %p342 = scmp.eq.s32.totalorder %s31, 7
      %p343 = por %p341, %p342
      %p344 = scmp.ne.s32.totalorder %s335, %s336
      %p345 = scmp.eq.s32.totalorder %s31, 0
      %p346 = por %p344, %p345
      %p347 = scmp.ne.s32.totalorder %s335, %s336
      %p348 = scmp.eq.s32.totalorder %s32, 7
      %p349 = por %p347, %p348
      %p351 = scmp.ne.s32.totalorder %s336, %s350
      %p352 = scmp.eq.s32.totalorder %s32, 0
      %p353 = por %p351, %p352
      %s355 = sadd.s32 %s354, 1
      %p358 = scmp.eq.s32.totalorder %s26, 7
      %p359 = scmp.ne.s32.totalorder %s354, %s356
      %p360 = scmp.eq.s32.totalorder %s26, 0
      %p361 = por %p359, %p360
      %p362 = scmp.ne.s32.totalorder %s354, %s356
      %p363 = scmp.eq.s32.totalorder %s31, 7
      %p364 = por %p362, %p363
      %p365 = scmp.ne.s32.totalorder %s356, %s357
      %p366 = scmp.eq.s32.totalorder %s31, 0
      %p367 = por %p365, %p366
      %p368 = scmp.ne.s32.totalorder %s356, %s357
      %p369 = scmp.eq.s32.totalorder %s32, 7
      %p370 = por %p368, %p369
      %p372 = scmp.ne.s32.totalorder %s357, %s371
      %p373 = scmp.eq.s32.totalorder %s32, 0
      %p374 = por %p372, %p373
      %s376 = sadd.s32 %s375, 1
      %p379 = scmp.eq.s32.totalorder %s26, 7
      %p380 = scmp.ne.s32.totalorder %s375, %s377
      %p381 = scmp.eq.s32.totalorder %s26, 0
      %p382 = por %p380, %p381
      %p383 = scmp.ne.s32.totalorder %s375, %s377
      %p384 = scmp.eq.s32.totalorder %s31, 7
      %p385 = por %p383, %p384
      %p386 = scmp.ne.s32.totalorder %s377, %s378
      %p387 = scmp.eq.s32.totalorder %s31, 0
      %p388 = por %p386, %p387
      %p389 = scmp.ne.s32.totalorder %s377, %s378
      %p390 = scmp.eq.s32.totalorder %s32, 7
      %p391 = por %p389, %p390
      %p393 = scmp.ne.s32.totalorder %s378, %s392
      %p394 = scmp.eq.s32.totalorder %s32, 0
      %p395 = por %p393, %p394
      %s396 = ssub.s32 %s26, %s33
      %p397 = scmp.eq.s32.totalorder %s396, 0
      %s399 = sadd.s32 %s398, 1
      %s400 = scalar_select %p397, %s398, %s399
      %p403 = pneg %p397
      %p404 = scmp.eq.s32.totalorder %s26, 7
      %p405 = por %p403, %p404
      %p406 = scmp.ne.s32.totalorder %s398, %s401
      %p407 = scmp.eq.s32.totalorder %s26, 0
      %p408 = por %p406, %p407
      %p409 = scmp.ne.s32.totalorder %s398, %s401
      %p410 = scmp.eq.s32.totalorder %s31, 7
      %p411 = por %p409, %p410
      %p412 = scmp.ne.s32.totalorder %s401, %s402
      %p413 = scmp.eq.s32.totalorder %s31, 0
      %p414 = por %p412, %p413
      %p415 = scmp.ne.s32.totalorder %s401, %s402
      %p416 = scmp.eq.s32.totalorder %s32, 7
      %p417 = por %p415, %p416
      %p419 = scmp.ne.s32.totalorder %s402, %s418
      %p420 = scmp.eq.s32.totalorder %s32, 0
      %p421 = por %p419, %p420
      %p422 = scmp.le.s32.totalorder 1, %s26
      %p423 = scmp.lt.s32.totalorder %s26, 9
      %p424 = pnand %p422, %p423
      %p425 = pneg %p424
      // Predicated region
      $region9: #{tpu_custom_call.1} parent=5 // pred_check
        _
      $region10: #{tpu_custom_call.1} parent=5 // pred_check_branch
        %427 = sbr.rel (%p424) target = $region12
      $region11: #{tpu_custom_call.1} parent=5 // pred_region
        %s428 = ssub.s32 %s26, 1
        // Predicated region
        $region13: #{tpu_custom_call.1} parent=11 // pred_check
          %p429 = pneg %p73
        $region14: #{tpu_custom_call.1} parent=11 // pred_check_branch
          %431 = sbr.rel (%p429) target = $region16
        $region15: #{tpu_custom_call.1} parent=11 // pred_region
          %433 = vsyncadd [#allocation3], 0
          %s434 = sshll.u32 %s1, 4
          %s435 = int_to_ptr.hbm [resolvable:$true] %s434
          %s436 = sshll.u32 [#allocation2], 4
          %s437 = int_to_ptr.vmem [resolvable:$true] %s436
          %442 = dma.hbm_to_vmem [thread:$0]  %s435, 512, %s437, [#allocation3], 64, 64, 4
        $region16: #{tpu_custom_call.1} parent=11 // pred_fallthru
          _
        // Predicated region
        $region17: #{tpu_custom_call.1} parent=11 // pred_check
          %p443 = pneg %p94
        $region18: #{tpu_custom_call.1} parent=11 // pred_check_branch
          %445 = sbr.rel (%p443) target = $region20
        $region19: #{tpu_custom_call.1} parent=11 // pred_region
          %447 = vsyncadd [#allocation5], 0
          %s449 = sshll.u32 %s2, 4
          %s450 = int_to_ptr.hbm [resolvable:$true] %s449
          %s451 = sshll.u32 [#allocation4], 4
          %s452 = int_to_ptr.vmem [resolvable:$true] %s451
          %454 = dma.hbm_to_vmem [thread:$0]  %s450, 16, %s452, [#allocation5]
        $region20: #{tpu_custom_call.1} parent=11 // pred_fallthru
          _
        // Predicated region
        $region21: #{tpu_custom_call.1} parent=11 // pred_check
          %p455 = pneg %p115
        $region22: #{tpu_custom_call.1} parent=11 // pred_check_branch
          %457 = sbr.rel (%p455) target = $region24
        $region23: #{tpu_custom_call.1} parent=11 // pred_region
          _
        $region24: #{tpu_custom_call.1} parent=11 // pred_fallthru
          _
        // Predicated region
        $region25: #{tpu_custom_call.1} parent=11 // pred_check
          %p458 = pneg %p136
        $region26: #{tpu_custom_call.1} parent=11 // pred_check_branch
          %460 = sbr.rel (%p458) target = $region28
        $region27: #{tpu_custom_call.1} parent=11 // pred_region
          %462 = vsyncadd [#allocation5], 0
          %s464 = sshll.u32 %s4, 4
          %s465 = int_to_ptr.hbm [resolvable:$true] %s464
          %s466 = sshll.u32 [#allocation6], 4
          %s467 = int_to_ptr.vmem [resolvable:$true] %s466
          %469 = dma.hbm_to_vmem [thread:$0]  %s465, 16, %s467, [#allocation5]
        $region28: #{tpu_custom_call.1} parent=11 // pred_fallthru
          _
        // Predicated region
        $region29: #{tpu_custom_call.1} parent=11 // pred_check
          %p470 = pneg %p157
        $region30: #{tpu_custom_call.1} parent=11 // pred_check_branch
          %472 = sbr.rel (%p470) target = $region32
        $region31: #{tpu_custom_call.1} parent=11 // pred_region
          _
        $region32: #{tpu_custom_call.1} parent=11 // pred_fallthru
          _
        // Predicated region
        $region33: #{tpu_custom_call.1} parent=11 // pred_check
          %p473 = pneg %p178
        $region34: #{tpu_custom_call.1} parent=11 // pred_check_branch
          %475 = sbr.rel (%p473) target = $region36
        $region35: #{tpu_custom_call.1} parent=11 // pred_region
          _
        $region36: #{tpu_custom_call.1} parent=11 // pred_fallthru
          _
        // Predicated region
        $region37: #{tpu_custom_call.1} parent=11 // pred_check
          %p476 = pneg %p199
        $region38: #{tpu_custom_call.1} parent=11 // pred_check_branch
          %478 = sbr.rel (%p476) target = $region40
        $region39: #{tpu_custom_call.1} parent=11 // pred_region
          _
        $region40: #{tpu_custom_call.1} parent=11 // pred_fallthru
          _
        // Predicated region
        $region41: #{tpu_custom_call.1} parent=11 // pred_check
          %p479 = pneg %p220
        $region42: #{tpu_custom_call.1} parent=11 // pred_check_branch
          %481 = sbr.rel (%p479) target = $region44
        $region43: #{tpu_custom_call.1} parent=11 // pred_region
          _
        $region44: #{tpu_custom_call.1} parent=11 // pred_fallthru
          _
        // Predicated region
        $region45: #{tpu_custom_call.1} parent=11 // pred_check
          %p482 = pneg %p241
        $region46: #{tpu_custom_call.1} parent=11 // pred_check_branch
          %484 = sbr.rel (%p482) target = $region48
        $region47: #{tpu_custom_call.1} parent=11 // pred_region
          _
        $region48: #{tpu_custom_call.1} parent=11 // pred_fallthru
          _
        // Predicated region
        $region49: #{tpu_custom_call.1} parent=11 // pred_check
          %p485 = pneg %p262
        $region50: #{tpu_custom_call.1} parent=11 // pred_check_branch
          %487 = sbr.rel (%p485) target = $region52
        $region51: #{tpu_custom_call.1} parent=11 // pred_region
          _
        $region52: #{tpu_custom_call.1} parent=11 // pred_fallthru
          _
        // Predicated region
        $region53: #{tpu_custom_call.1} parent=11 // pred_check
          %p488 = pneg %p283
        $region54: #{tpu_custom_call.1} parent=11 // pred_check_branch
          %490 = sbr.rel (%p488) target = $region56
        $region55: #{tpu_custom_call.1} parent=11 // pred_region
          _
        $region56: #{tpu_custom_call.1} parent=11 // pred_fallthru
          _
        // Predicated region
        $region57: #{tpu_custom_call.1} parent=11 // pred_check
          %p491 = pneg %p304
        $region58: #{tpu_custom_call.1} parent=11 // pred_check_branch
          %493 = sbr.rel (%p491) target = $region60
        $region59: #{tpu_custom_call.1} parent=11 // pred_region
          _
        $region60: #{tpu_custom_call.1} parent=11 // pred_fallthru
          _
        // Predicated region
        $region61: #{tpu_custom_call.1} parent=11 // pred_check
          %p494 = pneg %p325
        $region62: #{tpu_custom_call.1} parent=11 // pred_check_branch
          %496 = sbr.rel (%p494) target = $region64
        $region63: #{tpu_custom_call.1} parent=11 // pred_region
          _
        $region64: #{tpu_custom_call.1} parent=11 // pred_fallthru
          _
        // Predicated region
        $region65: #{tpu_custom_call.1} parent=11 // pred_check
          %p497 = pneg %p346
        $region66: #{tpu_custom_call.1} parent=11 // pred_check_branch
          %499 = sbr.rel (%p497) target = $region68
        $region67: #{tpu_custom_call.1} parent=11 // pred_region
          _
        $region68: #{tpu_custom_call.1} parent=11 // pred_fallthru
          _
        // Predicated region
        $region69: #{tpu_custom_call.1} parent=11 // pred_check
          %p500 = pneg %p367
        $region70: #{tpu_custom_call.1} parent=11 // pred_check_branch
          %502 = sbr.rel (%p500) target = $region72
        $region71: #{tpu_custom_call.1} parent=11 // pred_region
          %504 = vsyncadd [#allocation8], 0
          %s505 = sshll.u32 %s15, 4
          %s506 = int_to_ptr.hbm [resolvable:$true] %s505
          %s507 = sshll.u32 [#allocation7], 4
          %s508 = int_to_ptr.vmem [resolvable:$true] %s507
          %513 = dma.hbm_to_vmem [thread:$0]  %s506, 1024, %s508, [#allocation8], 64, 64, 4
        $region72: #{tpu_custom_call.1} parent=11 // pred_fallthru
          _
        // Predicated region
        $region73: #{tpu_custom_call.1} parent=11 // pred_check
          %p514 = pneg %p388
        $region74: #{tpu_custom_call.1} parent=11 // pred_check_branch
          %516 = sbr.rel (%p514) target = $region76
        $region75: #{tpu_custom_call.1} parent=11 // pred_region
          _
        $region76: #{tpu_custom_call.1} parent=11 // pred_fallthru
          _
      $region12: #{tpu_custom_call.1} parent=5 // pred_fallthru
        _
      %p517 = scmp.lt.s32.totalorder %s26, 8
      // Predicated region
      $region77: #{tpu_custom_call.1} parent=5 // pred_check
        %p518 = pneg %p517
      $region78: #{tpu_custom_call.1} parent=5 // pred_check_branch
        %520 = sbr.rel (%p518) target = $region80
      $region79: #{tpu_custom_call.1} parent=5 // pred_region
        // Predicated region
        $region81: #{tpu_custom_call.1} parent=79 // pred_check
          %p521 = pneg %p46
        $region82: #{tpu_custom_call.1} parent=79 // pred_check_branch
          %523 = sbr.rel (%p521) target = $region84
        $region83: #{tpu_custom_call.1} parent=79 // pred_region
          %s524 = smul.u32 4, %s26
          %p525 = scmp.lt.s32.totalorder %s524, 31
          %s526 = scalar_select %p525, %s524, 31
          %s527 = smul.addr %s526, 8
          %s528 = scalar_lea.vmem %s0, %s527
          %s529 = smul.u32 4, %s26
        $region84: #{tpu_custom_call.1} parent=79 // pred_fallthru
          _
      $region80: #{tpu_custom_call.1} parent=5 // pred_fallthru
        _
      %p530 = scmp.le.s32.totalorder 1, %s26
      %p531 = scmp.lt.s32.totalorder %s26, 9
      %p532 = pnand %p530, %p531
      %p533 = pneg %p532
      // Predicated region
      $region85: #{tpu_custom_call.1} parent=5 // pred_check
        _
      $region86: #{tpu_custom_call.1} parent=5 // pred_check_branch
        %535 = sbr.rel (%p532) target = $region88
      $region87: #{tpu_custom_call.1} parent=5 // pred_region
        %s536 = ssub.s32 %s26, 1
        // Predicated region
        $region89: #{tpu_custom_call.1} parent=87 // pred_check
          %p537 = pneg %p73
        $region90: #{tpu_custom_call.1} parent=87 // pred_check_branch
          %539 = sbr.rel (%p537) target = $region92
        $region91: #{tpu_custom_call.1} parent=87 // pred_region
          %541 = dma.done [#allocation3], 512
        $region92: #{tpu_custom_call.1} parent=87 // pred_fallthru
          _
        // Predicated region
        $region93: #{tpu_custom_call.1} parent=87 // pred_check
          %p542 = pneg %p94
        $region94: #{tpu_custom_call.1} parent=87 // pred_check_branch
          %544 = sbr.rel (%p542) target = $region96
        $region95: #{tpu_custom_call.1} parent=87 // pred_region
          %546 = dma.done [#allocation5], 16
        $region96: #{tpu_custom_call.1} parent=87 // pred_fallthru
          _
        // Predicated region
        $region97: #{tpu_custom_call.1} parent=87 // pred_check
          %p547 = pneg %p136
        $region98: #{tpu_custom_call.1} parent=87 // pred_check_branch
          %549 = sbr.rel (%p547) target = $region100
        $region99: #{tpu_custom_call.1} parent=87 // pred_region
          %551 = dma.done [#allocation5], 16
        $region100: #{tpu_custom_call.1} parent=87 // pred_fallthru
          _
        // Predicated region
        $region101: #{tpu_custom_call.1} parent=87 // pred_check
          %p552 = pneg %p367
        $region102: #{tpu_custom_call.1} parent=87 // pred_check_branch
          %554 = sbr.rel (%p552) target = $region104
        $region103: #{tpu_custom_call.1} parent=87 // pred_region
          %556 = dma.done [#allocation8], 1024
        $region104: #{tpu_custom_call.1} parent=87 // pred_fallthru
          _
        %s557 = smul.u32 4, %s31
        %p558 = scmp.lt.s32.totalorder %s557, 31
        %s559 = scalar_select %p558, %s557, 31
        %s560 = smul.addr %s559, 8
        %s561 = scalar_lea.vmem %s0, %s560
        %p562 = pneg %p52
        %p563 = pneg %p49
        %p564 = pneg %p73
        %p565 = pneg %p70
        %p566 = pneg %p94
        %p567 = pneg %p91
        %p568 = pneg %p115
        %p569 = pneg %p112
        %p570 = pneg %p136
        %p571 = pneg %p133
        %p572 = pneg %p157
        %p573 = pneg %p154
        %p574 = pneg %p178
        %p575 = pneg %p175
        %p576 = pneg %p199
        %p577 = pneg %p196
        %p578 = pneg %p220
        %p579 = pneg %p217
        %p580 = pneg %p241
        %p581 = pneg %p238
        %p582 = pneg %p262
        %p583 = pneg %p259
        %p584 = pneg %p283
        %p585 = pneg %p280
        %p586 = pneg %p304
        %p587 = pneg %p301
        %p588 = pneg %p325
        %p589 = pneg %p322
        %p590 = pneg %p346
        %p591 = pneg %p343
        %p592 = pneg %p367
        %p593 = pneg %p364
        %p594 = pneg %p388
        %p595 = pneg %p385
        %p596 = pneg %p414
        %p597 = pneg %p411
        %s598 = smul.u32 4, %s31
        %p599 = scmp.lt.s32.totalorder %s598, 31
        %s600 = scalar_select %p599, %s598, 31
        %s601 = smul.addr %s600, 8
        %s602 = scalar_lea.vmem %s17, %s601
        %s603 = smul.u32 4, %s31
        %p604 = scmp.lt.s32.totalorder %s603, 31
        %s605 = scalar_select %p604, %s603, 31
        %s606 = smul.addr %s605, 8
        %s607 = scalar_lea.vmem %s0, %s606
        %s608 = smul.u32 4, %s31
        %s609 = smul.u32 4, %s31
        %p610 = scmp.lt.s32.totalorder %s609, 31
        %s611 = scalar_select %p610, %s609, 31
        %s612 = smul.addr %s611, 8
        %s613 = scalar_lea.vmem %s17, %s612
        %s614 = smul.u32 4, %s31
        %v616 = vld [vmem:[%s607] sm:$0xff]
        %v617 = vld [vmem:[%s607 + $0x8] sm:$0xff]
        %v618 = vld [vmem:[%s607 + $0x10] sm:$0xff]
        %v619 = vld [vmem:[%s607 + $0x18] sm:$0xff]
        %v620 = vpack.c.bf16 %v617, %v616
        %v621 = vpack.c.bf16 %v619, %v618
        %v622 = vld [vmem:[#allocation4] sm:$0x1]
        %v623 = vld [vmem:[#allocation2] sm:$0xf]
        %v624 = vld [vmem:[#allocation2 + $0x4] sm:$0xf]
        %v625 = vld [vmem:[#allocation2 + $0x8] sm:$0xf]
        %v626 = vld [vmem:[#allocation2 + $0xc] sm:$0xf]
        %v627 = vld [vmem:[#allocation2 + $0x10] sm:$0xf]
        %v628 = vld [vmem:[#allocation2 + $0x14] sm:$0xf]
        %v629 = vld [vmem:[#allocation2 + $0x18] sm:$0xf]
        %v630 = vld [vmem:[#allocation2 + $0x1c] sm:$0xf]
        %v639 = vunpack.c.l.b16 %v623
        %v640 = vunpack.c.l.b16 %v624
        %v641 = vunpack.c.l.b16 %v625
        %v642 = vunpack.c.l.b16 %v626
        %v643 = vunpack.c.l.b16 %v627
        %v644 = vunpack.c.l.b16 %v628
        %v645 = vunpack.c.l.b16 %v629
        %v646 = vunpack.c.l.b16 %v630
        %v647 = vpack.c.b16 %v640, %v639
        %v648 = vpack.c.b16 %v642, %v641
        %v649 = vpack.c.b16 %v644, %v643
        %v650 = vpack.c.b16 %v646, %v645
        %vm655 = vcmask 523264
        %v657 = vsel %vm655, %v620, 0
        %v660 = vsel %vm655, %v621, 0
        %662 = vmatpush.bf16.msra.mxu0 0
        %663 = vmatpush.bf16.msra.mxu0 0
        %664 = vmatpush.bf16.msra.mxu0 0
        %665 = vmatpush.bf16.msra.mxu0 0
        %666 = vmatpush.bf16.msra.mxu0 %v650
        %667 = vmatpush.bf16.msra.mxu0 %v649
        %668 = vmatpush.bf16.msra.mxu0 %v648
        %669 = vmatpush.bf16.msra.mxu0 %v647
        %670 = vmatmul.bf16.gmra.mxu0 %v657
        %v671 = vpop.f32.mrf.mxu0
        %v672 = vadd.f32 0.0, %v671
        %v673 = vpop.f32.mrf.mxu0
        %v674 = vadd.f32 0.0, %v673
        %675 = vmatmul.bf16.gmra.mxu0 %v660
        %v676 = vpop.f32.mrf.mxu0
        %v677 = vadd.f32 0.0, %v676
        %v678 = vpop.f32.mrf.mxu0
        %v679 = vadd.f32 0.0, %v678
        %680 = vdwg.mxu0
        %v682 = vperm.slane %v622, 0
        %v684 = vadd.f32 %v682, %v672
        %v685 = vadd.f32 %v682, %v674
        %v686 = vadd.f32 %v682, %v677
        %v687 = vadd.f32 %v682, %v679
        %v688 = vmax.f32 %v684, 0.0
        %v689 = vmax.f32 %v685, 0.0
        %v690 = vmax.f32 %v686, 0.0
        %v691 = vmax.f32 %v687, 0.0
        %v692 = vpack.c.bf16 %v689, %v688
        %v693 = vpack.c.bf16 %v691, %v690
        %v694 = vld [vmem:[%s3] sm:$0xf]
        %v695 = vld [vmem:[%s3 + $0x4] sm:$0xf]
        %v696 = vld [vmem:[%s3 + $0x8] sm:$0xf]
        %v697 = vld [vmem:[%s3 + $0xc] sm:$0xf]
        %v698 = vld [vmem:[%s3 + $0x10] sm:$0xf]
        %v699 = vld [vmem:[%s3 + $0x14] sm:$0xf]
        %v700 = vld [vmem:[%s3 + $0x18] sm:$0xf]
        %v701 = vld [vmem:[%s3 + $0x1c] sm:$0xf]
        %v702 = vld [vmem:[%s3 + $0x20] sm:$0xf]
        %v703 = vld [vmem:[%s3 + $0x24] sm:$0xf]
        %v704 = vld [vmem:[%s3 + $0x28] sm:$0xf]
        %v705 = vld [vmem:[%s3 + $0x2c] sm:$0xf]
        %v706 = vld [vmem:[%s3 + $0x30] sm:$0xf]
        %v707 = vld [vmem:[%s3 + $0x34] sm:$0xf]
        %v708 = vld [vmem:[%s3 + $0x38] sm:$0xf]
        %v709 = vld [vmem:[%s3 + $0x3c] sm:$0xf]
        %v710 = vld [vmem:[#allocation6] sm:$0x1]
        %v712 = vperm.slane %v710, 0
        %v730 = vunpack.c.l.b16 %v694
        %v731 = vunpack.c.l.b16 %v695
        %v732 = vunpack.c.l.b16 %v696
        %v733 = vunpack.c.l.b16 %v697
        %v734 = vunpack.c.l.b16 %v698
        %v735 = vunpack.c.l.b16 %v699
        %v736 = vunpack.c.l.b16 %v700
        %v737 = vunpack.c.l.b16 %v701
        %v738 = vunpack.c.l.b16 %v702
        %v739 = vunpack.c.l.b16 %v703
        %v740 = vunpack.c.l.b16 %v704
        %v741 = vunpack.c.l.b16 %v705
        %v742 = vunpack.c.l.b16 %v706
        %v743 = vunpack.c.l.b16 %v707
        %v744 = vunpack.c.l.b16 %v708
        %v745 = vunpack.c.l.b16 %v709
        %v746 = vpack.c.b16 %v731, %v730
        %v747 = vpack.c.b16 %v733, %v732
        %v748 = vpack.c.b16 %v735, %v734
        %v749 = vpack.c.b16 %v737, %v736
        %v750 = vpack.c.b16 %v739, %v738
        %v751 = vpack.c.b16 %v741, %v740
        %v752 = vpack.c.b16 %v743, %v742
        %v753 = vpack.c.b16 %v745, %v744
        %762 = vmatpush.bf16.msra.mxu0 %v753
        %763 = vmatpush.bf16.msra.mxu0 %v752
        %764 = vmatpush.bf16.msra.mxu0 %v751
        %765 = vmatpush.bf16.msra.mxu0 %v750
        %766 = vmatpush.bf16.msra.mxu0 %v749
        %767 = vmatpush.bf16.msra.mxu0 %v748
        %768 = vmatpush.bf16.msra.mxu0 %v747
        %769 = vmatpush.bf16.msra.mxu0 %v746
        %770 = vmatmul.bf16.gmra.mxu0 %v692
        %v771 = vpop.f32.mrf.mxu0
        %v772 = vadd.f32 %v712, %v771
        %v773 = vpop.f32.mrf.mxu0
        %v774 = vadd.f32 %v712, %v773
        %775 = vmatmul.bf16.gmra.mxu0 %v693
        %v776 = vpop.f32.mrf.mxu0
        %v777 = vadd.f32 %v712, %v776
        %v778 = vpop.f32.mrf.mxu0
        %v779 = vadd.f32 %v712, %v778
        %780 = vdwg.mxu0
        %v781 = vmax.f32 %v772, 0.0
        %v782 = vmax.f32 %v774, 0.0
        %v783 = vmax.f32 %v777, 0.0
        %v784 = vmax.f32 %v779, 0.0
        %v785 = vpack.c.bf16 %v782, %v781
        %v786 = vpack.c.bf16 %v784, %v783
        %v787 = vld [vmem:[%s5] sm:$0xf]
        %v788 = vld [vmem:[%s5 + $0x4] sm:$0xf]
        %v789 = vld [vmem:[%s5 + $0x8] sm:$0xf]
        %v790 = vld [vmem:[%s5 + $0xc] sm:$0xf]
        %v791 = vld [vmem:[%s5 + $0x10] sm:$0xf]
        %v792 = vld [vmem:[%s5 + $0x14] sm:$0xf]
        %v793 = vld [vmem:[%s5 + $0x18] sm:$0xf]
        %v794 = vld [vmem:[%s5 + $0x1c] sm:$0xf]
        %v795 = vld [vmem:[%s5 + $0x20] sm:$0xf]
        %v796 = vld [vmem:[%s5 + $0x24] sm:$0xf]
        %v797 = vld [vmem:[%s5 + $0x28] sm:$0xf]
        %v798 = vld [vmem:[%s5 + $0x2c] sm:$0xf]
        %v799 = vld [vmem:[%s5 + $0x30] sm:$0xf]
        %v800 = vld [vmem:[%s5 + $0x34] sm:$0xf]
        %v801 = vld [vmem:[%s5 + $0x38] sm:$0xf]
        %v802 = vld [vmem:[%s5 + $0x3c] sm:$0xf]
        %v803 = vld [vmem:[%s6] sm:$0x1]
        %v805 = vperm.slane %v803, 0
        %v823 = vunpack.c.l.b16 %v787
        %v824 = vunpack.c.l.b16 %v788
        %v825 = vunpack.c.l.b16 %v789
        %v826 = vunpack.c.l.b16 %v790
        %v827 = vunpack.c.l.b16 %v791
        %v828 = vunpack.c.l.b16 %v792
        %v829 = vunpack.c.l.b16 %v793
        %v830 = vunpack.c.l.b16 %v794
        %v831 = vunpack.c.l.b16 %v795
        %v832 = vunpack.c.l.b16 %v796
        %v833 = vunpack.c.l.b16 %v797
        %v834 = vunpack.c.l.b16 %v798
        %v835 = vunpack.c.l.b16 %v799
        %v836 = vunpack.c.l.b16 %v800
        %v837 = vunpack.c.l.b16 %v801
        %v838 = vunpack.c.l.b16 %v802
        %v839 = vpack.c.b16 %v824, %v823
        %v840 = vpack.c.b16 %v826, %v825
        %v841 = vpack.c.b16 %v828, %v827
        %v842 = vpack.c.b16 %v830, %v829
        %v843 = vpack.c.b16 %v832, %v831
        %v844 = vpack.c.b16 %v834, %v833
        %v845 = vpack.c.b16 %v836, %v835
        %v846 = vpack.c.b16 %v838, %v837
        %855 = vmatpush.bf16.msra.mxu0 %v846
        %856 = vmatpush.bf16.msra.mxu0 %v845
        %857 = vmatpush.bf16.msra.mxu0 %v844
        %858 = vmatpush.bf16.msra.mxu0 %v843
        %859 = vmatpush.bf16.msra.mxu0 %v842
        %860 = vmatpush.bf16.msra.mxu0 %v841
        %861 = vmatpush.bf16.msra.mxu0 %v840
        %862 = vmatpush.bf16.msra.mxu0 %v839
        %863 = vmatmul.bf16.gmra.mxu0 %v785
        %v864 = vpop.f32.mrf.mxu0
        %v865 = vadd.f32 %v805, %v864
        %v866 = vpop.f32.mrf.mxu0
        %v867 = vadd.f32 %v805, %v866
        %868 = vmatmul.bf16.gmra.mxu0 %v786
        %v869 = vpop.f32.mrf.mxu0
        %v870 = vadd.f32 %v805, %v869
        %v871 = vpop.f32.mrf.mxu0
        %v872 = vadd.f32 %v805, %v871
        %873 = vdwg.mxu0
        %v874 = vmax.f32 %v865, 0.0
        %v875 = vmax.f32 %v867, 0.0
        %v876 = vmax.f32 %v870, 0.0
        %v877 = vmax.f32 %v872, 0.0
        %v878 = vpack.c.bf16 %v875, %v874
        %v879 = vpack.c.bf16 %v877, %v876
        %v880 = vld [vmem:[%s7] sm:$0xf]
        %v881 = vld [vmem:[%s7 + $0x4] sm:$0xf]
        %v882 = vld [vmem:[%s7 + $0x8] sm:$0xf]
        %v883 = vld [vmem:[%s7 + $0xc] sm:$0xf]
        %v884 = vld [vmem:[%s7 + $0x10] sm:$0xf]
        %v885 = vld [vmem:[%s7 + $0x14] sm:$0xf]
        %v886 = vld [vmem:[%s7 + $0x18] sm:$0xf]
        %v887 = vld [vmem:[%s7 + $0x1c] sm:$0xf]
        %v888 = vld [vmem:[%s7 + $0x20] sm:$0xf]
        %v889 = vld [vmem:[%s7 + $0x24] sm:$0xf]
        %v890 = vld [vmem:[%s7 + $0x28] sm:$0xf]
        %v891 = vld [vmem:[%s7 + $0x2c] sm:$0xf]
        %v892 = vld [vmem:[%s7 + $0x30] sm:$0xf]
        %v893 = vld [vmem:[%s7 + $0x34] sm:$0xf]
        %v894 = vld [vmem:[%s7 + $0x38] sm:$0xf]
        %v895 = vld [vmem:[%s7 + $0x3c] sm:$0xf]
        %v896 = vld [vmem:[%s8] sm:$0x1]
        %v898 = vperm.slane %v896, 0
        %v916 = vunpack.c.l.b16 %v880
        %v917 = vunpack.c.l.b16 %v881
        %v918 = vunpack.c.l.b16 %v882
        %v919 = vunpack.c.l.b16 %v883
        %v920 = vunpack.c.l.b16 %v884
        %v921 = vunpack.c.l.b16 %v885
        %v922 = vunpack.c.l.b16 %v886
        %v923 = vunpack.c.l.b16 %v887
        %v924 = vunpack.c.l.b16 %v888
        %v925 = vunpack.c.l.b16 %v889
        %v926 = vunpack.c.l.b16 %v890
        %v927 = vunpack.c.l.b16 %v891
        %v928 = vunpack.c.l.b16 %v892
        %v929 = vunpack.c.l.b16 %v893
        %v930 = vunpack.c.l.b16 %v894
        %v931 = vunpack.c.l.b16 %v895
        %v932 = vpack.c.b16 %v917, %v916
        %v933 = vpack.c.b16 %v919, %v918
        %v934 = vpack.c.b16 %v921, %v920
        %v935 = vpack.c.b16 %v923, %v922
        %v936 = vpack.c.b16 %v925, %v924
        %v937 = vpack.c.b16 %v927, %v926
        %v938 = vpack.c.b16 %v929, %v928
        %v939 = vpack.c.b16 %v931, %v930
        %948 = vmatpush.bf16.msra.mxu0 %v939
        %949 = vmatpush.bf16.msra.mxu0 %v938
        %950 = vmatpush.bf16.msra.mxu0 %v937
        %951 = vmatpush.bf16.msra.mxu0 %v936
        %952 = vmatpush.bf16.msra.mxu0 %v935
        %953 = vmatpush.bf16.msra.mxu0 %v934
        %954 = vmatpush.bf16.msra.mxu0 %v933
        %955 = vmatpush.bf16.msra.mxu0 %v932
        %956 = vmatmul.bf16.gmra.mxu0 %v878
        %v957 = vpop.f32.mrf.mxu0
        %v958 = vadd.f32 %v898, %v957
        %v959 = vpop.f32.mrf.mxu0
        %v960 = vadd.f32 %v898, %v959
        %961 = vmatmul.bf16.gmra.mxu0 %v879
        %v962 = vpop.f32.mrf.mxu0
        %v963 = vadd.f32 %v898, %v962
        %v964 = vpop.f32.mrf.mxu0
        %v965 = vadd.f32 %v898, %v964
        %966 = vdwg.mxu0
        %v967 = vmax.f32 %v958, 0.0
        %v968 = vmax.f32 %v960, 0.0
        %v969 = vmax.f32 %v963, 0.0
        %v970 = vmax.f32 %v965, 0.0
        %v971 = vpack.c.bf16 %v968, %v967
        %v972 = vpack.c.bf16 %v970, %v969
        %v973 = vld [vmem:[%s9] sm:$0xf]
        %v974 = vld [vmem:[%s9 + $0x4] sm:$0xf]
        %v975 = vld [vmem:[%s9 + $0x8] sm:$0xf]
        %v976 = vld [vmem:[%s9 + $0xc] sm:$0xf]
        %v977 = vld [vmem:[%s9 + $0x10] sm:$0xf]
        %v978 = vld [vmem:[%s9 + $0x14] sm:$0xf]
        %v979 = vld [vmem:[%s9 + $0x18] sm:$0xf]
        %v980 = vld [vmem:[%s9 + $0x1c] sm:$0xf]
        %v981 = vld [vmem:[%s9 + $0x20] sm:$0xf]
        %v982 = vld [vmem:[%s9 + $0x24] sm:$0xf]
        %v983 = vld [vmem:[%s9 + $0x28] sm:$0xf]
        %v984 = vld [vmem:[%s9 + $0x2c] sm:$0xf]
        %v985 = vld [vmem:[%s9 + $0x30] sm:$0xf]
        %v986 = vld [vmem:[%s9 + $0x34] sm:$0xf]
        %v987 = vld [vmem:[%s9 + $0x38] sm:$0xf]
        %v988 = vld [vmem:[%s9 + $0x3c] sm:$0xf]
        %v989 = vld [vmem:[%s10] sm:$0x1]
        %v991 = vperm.slane %v989, 0
        %v1009 = vunpack.c.l.b16 %v973
        %v1010 = vunpack.c.l.b16 %v974
        %v1011 = vunpack.c.l.b16 %v975
        %v1012 = vunpack.c.l.b16 %v976
        %v1013 = vunpack.c.l.b16 %v977
        %v1014 = vunpack.c.l.b16 %v978
        %v1015 = vunpack.c.l.b16 %v979
        %v1016 = vunpack.c.l.b16 %v980
        %v1017 = vunpack.c.l.b16 %v981
        %v1018 = vunpack.c.l.b16 %v982
        %v1019 = vunpack.c.l.b16 %v983
        %v1020 = vunpack.c.l.b16 %v984
        %v1021 = vunpack.c.l.b16 %v985
        %v1022 = vunpack.c.l.b16 %v986
        %v1023 = vunpack.c.l.b16 %v987
        %v1024 = vunpack.c.l.b16 %v988
        %v1025 = vpack.c.b16 %v1010, %v1009
        %v1026 = vpack.c.b16 %v1012, %v1011
        %v1027 = vpack.c.b16 %v1014, %v1013
        %v1028 = vpack.c.b16 %v1016, %v1015
        %v1029 = vpack.c.b16 %v1018, %v1017
        %v1030 = vpack.c.b16 %v1020, %v1019
        %v1031 = vpack.c.b16 %v1022, %v1021
        %v1032 = vpack.c.b16 %v1024, %v1023
        %1041 = vmatpush.bf16.msra.mxu0 %v1032
        %1042 = vmatpush.bf16.msra.mxu0 %v1031
        %1043 = vmatpush.bf16.msra.mxu0 %v1030
        %1044 = vmatpush.bf16.msra.mxu0 %v1029
        %1045 = vmatpush.bf16.msra.mxu0 %v1028
        %1046 = vmatpush.bf16.msra.mxu0 %v1027
        %1047 = vmatpush.bf16.msra.mxu0 %v1026
        %1048 = vmatpush.bf16.msra.mxu0 %v1025
        %1049 = vmatmul.bf16.gmra.mxu0 %v971
        %v1050 = vpop.f32.mrf.mxu0
        %v1051 = vadd.f32 %v991, %v1050
        %v1052 = vpop.f32.mrf.mxu0
        %v1053 = vadd.f32 %v991, %v1052
        %1054 = vmatmul.bf16.gmra.mxu0 %v972
        %v1055 = vpop.f32.mrf.mxu0
        %v1056 = vadd.f32 %v991, %v1055
        %v1057 = vpop.f32.mrf.mxu0
        %v1058 = vadd.f32 %v991, %v1057
        %1059 = vdwg.mxu0
        %v1060 = vmax.f32 %v1051, 0.0
        %v1061 = vmax.f32 %v1053, 0.0
        %v1062 = vmax.f32 %v1056, 0.0
        %v1063 = vmax.f32 %v1058, 0.0
        %v1064 = vpack.c.bf16 %v1061, %v1060
        %v1065 = vpack.c.bf16 %v1063, %v1062
        %v1066 = vld [vmem:[%s11] sm:$0xf]
        %v1067 = vld [vmem:[%s11 + $0x4] sm:$0xf]
        %v1068 = vld [vmem:[%s11 + $0x8] sm:$0xf]
        %v1069 = vld [vmem:[%s11 + $0xc] sm:$0xf]
        %v1070 = vld [vmem:[%s11 + $0x10] sm:$0xf]
        %v1071 = vld [vmem:[%s11 + $0x14] sm:$0xf]
        %v1072 = vld [vmem:[%s11 + $0x18] sm:$0xf]
        %v1073 = vld [vmem:[%s11 + $0x1c] sm:$0xf]
        %v1074 = vld [vmem:[%s11 + $0x20] sm:$0xf]
        %v1075 = vld [vmem:[%s11 + $0x24] sm:$0xf]
        %v1076 = vld [vmem:[%s11 + $0x28] sm:$0xf]
        %v1077 = vld [vmem:[%s11 + $0x2c] sm:$0xf]
        %v1078 = vld [vmem:[%s11 + $0x30] sm:$0xf]
        %v1079 = vld [vmem:[%s11 + $0x34] sm:$0xf]
        %v1080 = vld [vmem:[%s11 + $0x38] sm:$0xf]
        %v1081 = vld [vmem:[%s11 + $0x3c] sm:$0xf]
        %v1082 = vld [vmem:[%s12] sm:$0x1]
        %v1084 = vperm.slane %v1082, 0
        %v1102 = vunpack.c.l.b16 %v1066
        %v1103 = vunpack.c.l.b16 %v1067
        %v1104 = vunpack.c.l.b16 %v1068
        %v1105 = vunpack.c.l.b16 %v1069
        %v1106 = vunpack.c.l.b16 %v1070
        %v1107 = vunpack.c.l.b16 %v1071
        %v1108 = vunpack.c.l.b16 %v1072
        %v1109 = vunpack.c.l.b16 %v1073
        %v1110 = vunpack.c.l.b16 %v1074
        %v1111 = vunpack.c.l.b16 %v1075
        %v1112 = vunpack.c.l.b16 %v1076
        %v1113 = vunpack.c.l.b16 %v1077
        %v1114 = vunpack.c.l.b16 %v1078
        %v1115 = vunpack.c.l.b16 %v1079
        %v1116 = vunpack.c.l.b16 %v1080
        %v1117 = vunpack.c.l.b16 %v1081
        %v1118 = vpack.c.b16 %v1103, %v1102
        %v1119 = vpack.c.b16 %v1105, %v1104
        %v1120 = vpack.c.b16 %v1107, %v1106
        %v1121 = vpack.c.b16 %v1109, %v1108
        %v1122 = vpack.c.b16 %v1111, %v1110
        %v1123 = vpack.c.b16 %v1113, %v1112
        %v1124 = vpack.c.b16 %v1115, %v1114
        %v1125 = vpack.c.b16 %v1117, %v1116
        %1134 = vmatpush.bf16.msra.mxu0 %v1125
        %1135 = vmatpush.bf16.msra.mxu0 %v1124
        %1136 = vmatpush.bf16.msra.mxu0 %v1123
        %1137 = vmatpush.bf16.msra.mxu0 %v1122
        %1138 = vmatpush.bf16.msra.mxu0 %v1121
        %1139 = vmatpush.bf16.msra.mxu0 %v1120
        %1140 = vmatpush.bf16.msra.mxu0 %v1119
        %1141 = vmatpush.bf16.msra.mxu0 %v1118
        %1142 = vmatmul.bf16.gmra.mxu0 %v1064
        %v1143 = vpop.f32.mrf.mxu0
        %v1144 = vadd.f32 %v1084, %v1143
        %v1145 = vpop.f32.mrf.mxu0
        %v1146 = vadd.f32 %v1084, %v1145
        %1147 = vmatmul.bf16.gmra.mxu0 %v1065
        %v1148 = vpop.f32.mrf.mxu0
        %v1149 = vadd.f32 %v1084, %v1148
        %v1150 = vpop.f32.mrf.mxu0
        %v1151 = vadd.f32 %v1084, %v1150
        %1152 = vdwg.mxu0
        %v1153 = vmax.f32 %v1144, 0.0
        %v1154 = vmax.f32 %v1146, 0.0
        %v1155 = vmax.f32 %v1149, 0.0
        %v1156 = vmax.f32 %v1151, 0.0
        %v1157 = vpack.c.bf16 %v1154, %v1153
        %v1158 = vpack.c.bf16 %v1156, %v1155
        %v1159 = vld [vmem:[%s13] sm:$0xf]
        %v1160 = vld [vmem:[%s13 + $0x4] sm:$0xf]
        %v1161 = vld [vmem:[%s13 + $0x8] sm:$0xf]
        %v1162 = vld [vmem:[%s13 + $0xc] sm:$0xf]
        %v1163 = vld [vmem:[%s13 + $0x10] sm:$0xf]
        %v1164 = vld [vmem:[%s13 + $0x14] sm:$0xf]
        %v1165 = vld [vmem:[%s13 + $0x18] sm:$0xf]
        %v1166 = vld [vmem:[%s13 + $0x1c] sm:$0xf]
        %v1167 = vld [vmem:[%s13 + $0x20] sm:$0xf]
        %v1168 = vld [vmem:[%s13 + $0x24] sm:$0xf]
        %v1169 = vld [vmem:[%s13 + $0x28] sm:$0xf]
        %v1170 = vld [vmem:[%s13 + $0x2c] sm:$0xf]
        %v1171 = vld [vmem:[%s13 + $0x30] sm:$0xf]
        %v1172 = vld [vmem:[%s13 + $0x34] sm:$0xf]
        %v1173 = vld [vmem:[%s13 + $0x38] sm:$0xf]
        %v1174 = vld [vmem:[%s13 + $0x3c] sm:$0xf]
        %v1175 = vld [vmem:[%s14] sm:$0x1]
        %v1177 = vperm.slane %v1175, 0
        %v1195 = vunpack.c.l.b16 %v1159
        %v1196 = vunpack.c.l.b16 %v1160
        %v1197 = vunpack.c.l.b16 %v1161
        %v1198 = vunpack.c.l.b16 %v1162
        %v1199 = vunpack.c.l.b16 %v1163
        %v1200 = vunpack.c.l.b16 %v1164
        %v1201 = vunpack.c.l.b16 %v1165
        %v1202 = vunpack.c.l.b16 %v1166
        %v1203 = vunpack.c.l.b16 %v1167
        %v1204 = vunpack.c.l.b16 %v1168
        %v1205 = vunpack.c.l.b16 %v1169
        %v1206 = vunpack.c.l.b16 %v1170
        %v1207 = vunpack.c.l.b16 %v1171
        %v1208 = vunpack.c.l.b16 %v1172
        %v1209 = vunpack.c.l.b16 %v1173
        %v1210 = vunpack.c.l.b16 %v1174
        %v1211 = vpack.c.b16 %v1196, %v1195
        %v1212 = vpack.c.b16 %v1198, %v1197
        %v1213 = vpack.c.b16 %v1200, %v1199
        %v1214 = vpack.c.b16 %v1202, %v1201
        %v1215 = vpack.c.b16 %v1204, %v1203
        %v1216 = vpack.c.b16 %v1206, %v1205
        %v1217 = vpack.c.b16 %v1208, %v1207
        %v1218 = vpack.c.b16 %v1210, %v1209
        %1227 = vmatpush.bf16.msra.mxu0 %v1218
        %1228 = vmatpush.bf16.msra.mxu0 %v1217
        %1229 = vmatpush.bf16.msra.mxu0 %v1216
        %1230 = vmatpush.bf16.msra.mxu0 %v1215
        %1231 = vmatpush.bf16.msra.mxu0 %v1214
        %1232 = vmatpush.bf16.msra.mxu0 %v1213
        %1233 = vmatpush.bf16.msra.mxu0 %v1212
        %1234 = vmatpush.bf16.msra.mxu0 %v1211
        %1235 = vmatmul.bf16.gmra.mxu0 %v1157
        %v1236 = vpop.f32.mrf.mxu0
        %v1237 = vadd.f32 %v1177, %v1236
        %v1238 = vpop.f32.mrf.mxu0
        %v1239 = vadd.f32 %v1177, %v1238
        %1240 = vmatmul.bf16.gmra.mxu0 %v1158
        %v1241 = vpop.f32.mrf.mxu0
        %v1242 = vadd.f32 %v1177, %v1241
        %v1243 = vpop.f32.mrf.mxu0
        %v1244 = vadd.f32 %v1177, %v1243
        %1245 = vdwg.mxu0
        %v1246 = vmax.f32 %v1237, 0.0
        %v1247 = vmax.f32 %v1239, 0.0
        %v1248 = vmax.f32 %v1242, 0.0
        %v1249 = vmax.f32 %v1244, 0.0
        %v1250 = vpack.c.bf16 %v1247, %v1246
        %v1251 = vpack.c.bf16 %v1249, %v1248
        %v1252 = vld [vmem:[#allocation7] sm:$0xf]
        %v1253 = vld [vmem:[#allocation7 + $0x4] sm:$0xf]
        %v1254 = vld [vmem:[#allocation7 + $0x8] sm:$0xf]
        %v1255 = vld [vmem:[#allocation7 + $0xc] sm:$0xf]
        %v1256 = vld [vmem:[#allocation7 + $0x10] sm:$0xf]
        %v1257 = vld [vmem:[#allocation7 + $0x14] sm:$0xf]
        %v1258 = vld [vmem:[#allocation7 + $0x18] sm:$0xf]
        %v1259 = vld [vmem:[#allocation7 + $0x1c] sm:$0xf]
        %v1260 = vld [vmem:[#allocation7 + $0x20] sm:$0xf]
        %v1261 = vld [vmem:[#allocation7 + $0x24] sm:$0xf]
        %v1262 = vld [vmem:[#allocation7 + $0x28] sm:$0xf]
        %v1263 = vld [vmem:[#allocation7 + $0x2c] sm:$0xf]
        %v1264 = vld [vmem:[#allocation7 + $0x30] sm:$0xf]
        %v1265 = vld [vmem:[#allocation7 + $0x34] sm:$0xf]
        %v1266 = vld [vmem:[#allocation7 + $0x38] sm:$0xf]
        %v1267 = vld [vmem:[#allocation7 + $0x3c] sm:$0xf]
        %v1268 = vld [vmem:[%s16] sm:$0x1]
        %v1270 = vperm.slane %v1268, 0
        %v1288 = vunpack.c.l.b16 %v1252
        %v1289 = vunpack.c.l.b16 %v1253
        %v1290 = vunpack.c.l.b16 %v1254
        %v1291 = vunpack.c.l.b16 %v1255
        %v1292 = vunpack.c.l.b16 %v1256
        %v1293 = vunpack.c.l.b16 %v1257
        %v1294 = vunpack.c.l.b16 %v1258
        %v1295 = vunpack.c.l.b16 %v1259
        %v1296 = vunpack.c.l.b16 %v1260
        %v1297 = vunpack.c.l.b16 %v1261
        %v1298 = vunpack.c.l.b16 %v1262
        %v1299 = vunpack.c.l.b16 %v1263
        %v1300 = vunpack.c.l.b16 %v1264
        %v1301 = vunpack.c.l.b16 %v1265
        %v1302 = vunpack.c.l.b16 %v1266
        %v1303 = vunpack.c.l.b16 %v1267
        %v1304 = vpack.c.b16 %v1289, %v1288
        %v1305 = vpack.c.b16 %v1291, %v1290
        %v1306 = vpack.c.b16 %v1293, %v1292
        %v1307 = vpack.c.b16 %v1295, %v1294
        %v1308 = vpack.c.b16 %v1297, %v1296
        %v1309 = vpack.c.b16 %v1299, %v1298
        %v1310 = vpack.c.b16 %v1301, %v1300
        %v1311 = vpack.c.b16 %v1303, %v1302
        %1320 = vmatpush.bf16.msra.mxu0 %v1311
        %1321 = vmatpush.bf16.msra.mxu0 %v1310
        %1322 = vmatpush.bf16.msra.mxu0 %v1309
        %1323 = vmatpush.bf16.msra.mxu0 %v1308
        %1324 = vmatpush.bf16.msra.mxu0 %v1307
        %1325 = vmatpush.bf16.msra.mxu0 %v1306
        %1326 = vmatpush.bf16.msra.mxu0 %v1305
        %1327 = vmatpush.bf16.msra.mxu0 %v1304
        %1328 = vmatmul.bf16.gmra.mxu0 %v1250
        %v1329 = vpop.f32.mrf.mxu0
        %v1330 = vadd.f32 %v1270, %v1329
        %v1331 = vpop.f32.mrf.mxu0
        %v1332 = vadd.f32 %v1270, %v1331
        %1333 = vmatmul.bf16.gmra.mxu0 %v1251
        %v1334 = vpop.f32.mrf.mxu0
        %v1335 = vadd.f32 %v1270, %v1334
        %v1336 = vpop.f32.mrf.mxu0
        %v1337 = vadd.f32 %v1270, %v1336
        %1338 = vdwg.mxu0
        %vm1339 = vcmask 7168
        %1340 = vst.msk [vmem:[%s613] sm:$0xff] %vm1339, %v1330
        %1341 = vst.msk [vmem:[%s613 + $0x8] sm:$0xff] %vm1339, %v1332
        %1342 = vst.msk [vmem:[%s613 + $0x10] sm:$0xff] %vm1339, %v1335
        %1343 = vst.msk [vmem:[%s613 + $0x18] sm:$0xff] %vm1339, %v1337
        %s1344 = smul.u32 4, %s31
        %p1345 = scmp.lt.s32.totalorder %s1344, 31
        %s1346 = scalar_select %p1345, %s1344, 31
        %s1347 = smul.addr %s1346, 8
        %s1348 = scalar_lea.vmem %s17, %s1347
        // Predicated region
        $region105: #{tpu_custom_call.1} parent=87 // pred_check
          %p1349 = pneg %p411
        $region106: #{tpu_custom_call.1} parent=87 // pred_check_branch
          %1351 = sbr.rel (%p1349) target = $region108
        $region107: #{tpu_custom_call.1} parent=87 // pred_region
          %s1352 = smul.u32 4, %s31
        $region108: #{tpu_custom_call.1} parent=87 // pred_fallthru
          _
      $region88: #{tpu_custom_call.1} parent=5 // pred_fallthru
        _
      %p1353 = scmp.le.s32.totalorder 2, %s26
      // Predicated region
      $region109: #{tpu_custom_call.1} parent=5 // pred_check
        %p1354 = pneg %p1353
      $region110: #{tpu_custom_call.1} parent=5 // pred_check_branch
        %1356 = sbr.rel (%p1354) target = $region112
      $region111: #{tpu_custom_call.1} parent=5 // pred_region
        %s1357 = ssub.s32 %s26, 2
        // Predicated region
        $region113: #{tpu_custom_call.1} parent=111 // pred_check
          %p1358 = pneg %p417
        $region114: #{tpu_custom_call.1} parent=111 // pred_check_branch
          %1360 = sbr.rel (%p1358) target = $region116
        $region115: #{tpu_custom_call.1} parent=111 // pred_region
          %s1361 = smul.u32 4, %s32
          %p1362 = scmp.lt.s32.totalorder %s1361, 31
          %s1363 = scalar_select %p1362, %s1361, 31
          %s1364 = smul.addr %s1363, 8
          %s1365 = scalar_lea.vmem %s17, %s1364
        $region116: #{tpu_custom_call.1} parent=111 // pred_fallthru
          _
      $region112: #{tpu_custom_call.1} parent=5 // pred_fallthru
        _
    $region6: #{tpu_custom_call.1} parent=1 // loop_footer
      %s30 = sadd.s32 1, %s26
    $region7: #{tpu_custom_call.1} parent=1 // loop_footer_branch
      %25 = sbr.rel target = $region3
    $region8: #{tpu_custom_call.1} parent=1 // loop_exit
      _
    %1366 = vsyncpa [#allocation3], 1
    %s1367 = scalar_lea.sflag [#allocation3], 1
    %1368 = vsyncpa %s1367, 1
    %1369 = vsyncpa [#allocation5], 1
    %1370 = vsyncpa [#allocation8], 1

</llo_original>
